<compile_context>
chip_gen: v7x
topology: tpu7x:2x2x1
jax: 0.10.0
libtpu: 0.0.40
codegen_flags: <defaults>
</compile_context>

<pallas_src>
import functools

import jax
import jax.numpy as jnp
from jax.experimental import pallas as pl
from jax.experimental.pallas import tpu as pltpu


def gru_classifier_kernel(x_ref, wih_ref, whh_ref, bias_i_ref, bhn_ref,
                          w1_ref, b1_ref, w2_ref, b2_ref,
                          out_ref, gi_ref, *, seq_len, batch):
    H = whh_ref.shape[0]

    # ---- Phase 1: input projection for ALL timesteps in one MXU pass. ------
    # x_ref is (T*B, E) bf16 (row t*B + b is timestep t, batch b).
    # bias_i already holds b_ih + [b_hr | b_hz | 0].
    gi_ref[...] = (
        jnp.dot(x_ref[...], wih_ref[...], preferred_element_type=jnp.float32)
        + bias_i_ref[...])

    # Hoist loop-invariant loads.
    whh = whh_ref[...]            # (H, 3H) bf16
    bhn = bhn_ref[...]            # (1, H)  f32  (b_hn must stay inside r*(...))

    # ---- Phase 2: serial GRU recurrence (only the h projection per step). --
    def step(t, h):
        row = pl.multiple_of(t * batch, batch)
        gi = gi_ref[pl.ds(row, batch), :]                       # (B, 3H) f32
        gh = jnp.dot(h.astype(jnp.bfloat16), whh,
                     preferred_element_type=jnp.float32)        # (B, 3H) f32
        r = jax.nn.sigmoid(gi[:, 0 * H:1 * H] + gh[:, 0 * H:1 * H])
        z = jax.nn.sigmoid(gi[:, 1 * H:2 * H] + gh[:, 1 * H:2 * H])
        n = jnp.tanh(gi[:, 2 * H:3 * H] + r * (gh[:, 2 * H:3 * H] + bhn))
        return (1.0 - z) * n + z * h

    h0 = jnp.zeros((batch, H), jnp.float32)
    h_n = jax.lax.fori_loop(0, seq_len, step, h0, unroll=True)

    # ---- Phase 3: classifier head Linear -> ReLU -> Linear (lane-padded). --
    y1 = jnp.dot(h_n.astype(jnp.bfloat16), w1_ref[...],
                 preferred_element_type=jnp.float32) + b1_ref[...]
    y1 = jnp.maximum(y1, 0.0)
    out_ref[...] = jnp.dot(y1.astype(jnp.bfloat16), w2_ref[...],
                           preferred_element_type=jnp.float32) + b2_ref[...]


@jax.jit
def classifier_forward(tokens, params):
    """tokens: (B, T, E) float32. Returns logits (B, n_classes)."""
    B, T, E = tokens.shape
    H = params["whh_t"].shape[0]
    C = params["w2_t"].shape[1]
    C_PAD = 128  # lane-dense output block; sliced back to C below.

    # (B, T, E) -> (T*B, E), bf16 for the MXU.
    x2d = jnp.swapaxes(tokens, 0, 1).reshape(T * B, E).astype(jnp.bfloat16)

    wih = params["wih_t"].astype(jnp.bfloat16)          # (E, 3H)
    whh = params["whh_t"].astype(jnp.bfloat16)          # (H, 3H)
    # Fold b_ih + [b_hr | b_hz | 0] into a single bias (f32); keep b_hn apart.
    bias_i = params["bih"] + jnp.concatenate(
        [params["bhh"][:, :2 * H], jnp.zeros((1, H), jnp.float32)], axis=1)
    bhn = params["bhh"][:, 2 * H:]                      # (1, H)

    w1 = params["w1_t"].astype(jnp.bfloat16)            # (H, H)
    b1 = params["b1"]                                   # (1, H)
    w2 = jnp.zeros((H, C_PAD), jnp.bfloat16).at[:, :C].set(
        params["w2_t"].astype(jnp.bfloat16))
    b2 = jnp.zeros((1, C_PAD), jnp.float32).at[:, :C].set(params["b2"])

    vmem = pl.BlockSpec(memory_space=pltpu.MemorySpace.VMEM)
    kernel = functools.partial(gru_classifier_kernel, seq_len=T, batch=B)

    # TODO(synk): on v7x a second TensorCore could take half the batch via a
    # leading 'parallel' grid axis; at B=8 it is not worth the extra padding.
    out = pl.pallas_call(
        kernel,
        out_shape=jax.ShapeDtypeStruct((B, C_PAD), jnp.float32),
        in_specs=[vmem] * 9,
        out_specs=vmem,
        scratch_shapes=[pltpu.VMEM((T * B, 3 * H), jnp.float32)],
    )(x2d, wih, whh, bias_i, bhn, w1, b1, w2, b2)
    return out[:, :C]


def init_params(key, embedding_size, hidden_size, n_classes):
    """Deterministic PyTorch-like uniform(-1/sqrt(H), 1/sqrt(H)) init."""
    H, E, C = hidden_size, embedding_size, n_classes
    ks = jax.random.split(key, 8)
    bound = 1.0 / jnp.sqrt(jnp.float32(H))
    u = lambda k, shape: jax.random.uniform(k, shape, jnp.float32, -bound, bound)
    # GRU weights stored pre-transposed for x @ W^T layout: (in, 3H), gates [r|z|n].
    return {
        "wih_t": u(ks[0], (E, 3 * H)),
        "whh_t": u(ks[1], (H, 3 * H)),
        "bih":   u(ks[2], (1, 3 * H)),
        "bhh":   u(ks[3], (1, 3 * H)),
        "w1_t":  u(ks[4], (H, H)),
        "b1":    u(ks[5], (1, H)),
        "w2_t":  u(ks[6], (H, C)),
        "b2":    u(ks[7], (1, C)),
    }


def reference_forward(tokens, params):
    """Pure-JAX reference (lax.scan GRU + MLP) mirroring the kernel numerics
    (bf16 MXU operands, f32 accumulation, f32 gate math) and matching PyTorch
    GRU semantics."""
    B, T, E = tokens.shape
    H = params["whh_t"].shape[0]
    x = jnp.swapaxes(tokens, 0, 1).astype(jnp.bfloat16)        # (T, B, E)
    wih = params["wih_t"].astype(jnp.bfloat16)
    whh = params["whh_t"].astype(jnp.bfloat16)
    bih, bhh = params["bih"], params["bhh"]

    def step(h, x_t):
        gi = jnp.dot(x_t, wih, preferred_element_type=jnp.float32) + bih
        gh = jnp.dot(h.astype(jnp.bfloat16), whh,
                     preferred_element_type=jnp.float32) + bhh
        r = jax.nn.sigmoid(gi[:, :H] + gh[:, :H])
        z = jax.nn.sigmoid(gi[:, H:2 * H] + gh[:, H:2 * H])
        n = jnp.tanh(gi[:, 2 * H:] + r * gh[:, 2 * H:])
        h_new = (1.0 - z) * n + z * h
        return h_new, None

    h0 = jnp.zeros((B, H), jnp.float32)
    h_n, _ = jax.lax.scan(step, h0, x)
    y1 = jnp.maximum(
        jnp.dot(h_n.astype(jnp.bfloat16), params["w1_t"].astype(jnp.bfloat16),
                preferred_element_type=jnp.float32) + params["b1"], 0.0)
    return jnp.dot(y1.astype(jnp.bfloat16), params["w2_t"].astype(jnp.bfloat16),
                   preferred_element_type=jnp.float32) + params["b2"]


if __name__ == "__main__":
    # Small shapes consistent with the module: (B, T, embedding_size),
    # hidden size H, n_classes=4.
    B, T, E, H, C = 8, 8, 128, 128, 4

    key = jax.random.PRNGKey(0)
    k_params, k_tokens = jax.random.split(key)
    params = init_params(k_params, embedding_size=E, hidden_size=H, n_classes=C)
    tokens = jax.random.normal(k_tokens, (B, T, E), jnp.float32)

    logits = jax.block_until_ready(classifier_forward(tokens, params))

    ref = reference_forward(tokens, params)
    assert logits.shape == (B, C)
    assert jnp.allclose(logits, ref, atol=2e-3, rtol=2e-3), "mismatch vs JAX reference"

    print("KERNEL_OK")
</pallas_src>

<mosaic_0001>
module attributes {stable_mosaic.version = 11 : i64} {
  func.func @gru_classifier_kernel(%arg0: memref<64x128xbf16, #tpu.memory_space<vmem>>, %arg1: memref<128x384xbf16, #tpu.memory_space<vmem>>, %arg2: memref<128x384xbf16, #tpu.memory_space<vmem>>, %arg3: memref<1x384xf32, #tpu.memory_space<vmem>>, %arg4: memref<1x128xf32, #tpu.memory_space<vmem>>, %arg5: memref<128x128xbf16, #tpu.memory_space<vmem>>, %arg6: memref<1x128xf32, #tpu.memory_space<vmem>>, %arg7: memref<128x128xbf16, #tpu.memory_space<vmem>>, %arg8: memref<1x128xf32, #tpu.memory_space<vmem>>, %arg9: memref<8x128xf32, #tpu.memory_space<vmem>>, %arg10: memref<64x384xf32, #tpu.memory_space<vmem>>) attributes {dimension_semantics = [], scalar_prefetch = 0 : i64, scratch_operands = 1 : i64, tpu.core_type = #tpu.core_type<tc>} {
    %c0 = arith.constant 0 : index
    %c0_0 = arith.constant 0 : index
    %0 = vector.load %arg0[%c0, %c0_0] : memref<64x128xbf16, #tpu.memory_space<vmem>>, vector<64x128xbf16>
    %c0_1 = arith.constant 0 : index
    %c0_2 = arith.constant 0 : index
    %1 = vector.load %arg1[%c0_1, %c0_2] : memref<128x384xbf16, #tpu.memory_space<vmem>>, vector<128x384xbf16>
    %cst = arith.constant dense<0.000000e+00> : vector<64x384xf32>
    %2 = tpu.matmul %0, %1, %cst {dimension_numbers = #tpu.dot_dimension_numbers<[1], [0], [0], [1], [0, 0, 1, 1], [], []>} : vector<64x128xbf16>, vector<128x384xbf16>, vector<64x384xf32> -> vector<64x384xf32>
    %c0_3 = arith.constant 0 : index
    %c0_4 = arith.constant 0 : index
    %3 = vector.load %arg3[%c0_3, %c0_4] : memref<1x384xf32, #tpu.memory_space<vmem>>, vector<1x384xf32>
    %4 = vector.broadcast %3 : vector<1x384xf32> to vector<64x384xf32>
    %5 = arith.addf %2, %4 : vector<64x384xf32>
    %c0_5 = arith.constant 0 : index
    %c0_6 = arith.constant 0 : index
    %6 = vector.load %arg10[%c0_5, %c0_6] : memref<64x384xf32, #tpu.memory_space<vmem>>, vector<64x384xf32>
    tpu.vector_store %arg10[%c0_5, %c0_6], %5 {strides = array<i32>} : memref<64x384xf32, #tpu.memory_space<vmem>>, vector<64x384xf32>,
    %c0_7 = arith.constant 0 : index
    %c0_8 = arith.constant 0 : index
    %7 = vector.load %arg2[%c0_7, %c0_8] : memref<128x384xbf16, #tpu.memory_space<vmem>>, vector<128x384xbf16>
    %c0_9 = arith.constant 0 : index
    %c0_10 = arith.constant 0 : index
    %8 = vector.load %arg4[%c0_9, %c0_10] : memref<1x128xf32, #tpu.memory_space<vmem>>, vector<1x128xf32>
    %cst_11 = arith.constant 0.000000e+00 : f32
    %9 = vector.broadcast %cst_11 : f32 to vector<8x128xf32>
    %c0_i32 = arith.constant 0 : i32
    %c8_i32 = arith.constant 8 : i32
    %10 = arith.muli %c0_i32, %c8_i32 : i32
    %11 = tpu.assume_multiple %10, 8 : i32
    %12 = arith.index_cast %11 : i32 to index
    %c0_12 = arith.constant 0 : index
    %13 = vector.load %arg10[%12, %c0_12] : memref<64x384xf32, #tpu.memory_space<vmem>>, vector<8x384xf32>
    %14 = arith.truncf %9 : vector<8x128xf32> to vector<8x128xbf16>
    %cst_13 = arith.constant dense<0.000000e+00> : vector<8x384xf32>
    %15 = tpu.matmul %14, %7, %cst_13 {dimension_numbers = #tpu.dot_dimension_numbers<[1], [0], [0], [1], [0, 0, 1, 1], [], []>} : vector<8x128xbf16>, vector<128x384xbf16>, vector<8x384xf32> -> vector<8x384xf32>
    %16 = vector.extract_strided_slice %13 {offsets = [0, 0], sizes = [8, 128], strides = [1, 1]} : vector<8x384xf32> to vector<8x128xf32>
    %17 = vector.extract_strided_slice %15 {offsets = [0, 0], sizes = [8, 128], strides = [1, 1]} : vector<8x384xf32> to vector<8x128xf32>
    %18 = arith.addf %16, %17 : vector<8x128xf32>
    %19 = arith.negf %18 : vector<8x128xf32>
    %20 = math.exp %19 : vector<8x128xf32>
    %cst_14 = arith.constant 1.000000e+00 : f32
    %21 = vector.broadcast %cst_14 : f32 to vector<8x128xf32>
    %22 = arith.addf %21, %20 : vector<8x128xf32>
    %23 = arith.divf %21, %22 : vector<8x128xf32>
    %24 = vector.extract_strided_slice %13 {offsets = [0, 128], sizes = [8, 128], strides = [1, 1]} : vector<8x384xf32> to vector<8x128xf32>
    %25 = vector.extract_strided_slice %15 {offsets = [0, 128], sizes = [8, 128], strides = [1, 1]} : vector<8x384xf32> to vector<8x128xf32>
    %26 = arith.addf %24, %25 : vector<8x128xf32>
    %27 = arith.negf %26 : vector<8x128xf32>
    %28 = math.exp %27 : vector<8x128xf32>
    %cst_15 = arith.constant 1.000000e+00 : f32
    %29 = vector.broadcast %cst_15 : f32 to vector<8x128xf32>
    %30 = arith.addf %29, %28 : vector<8x128xf32>
    %31 = arith.divf %29, %30 : vector<8x128xf32>
    %32 = vector.extract_strided_slice %13 {offsets = [0, 256], sizes = [8, 128], strides = [1, 1]} : vector<8x384xf32> to vector<8x128xf32>
    %33 = vector.extract_strided_slice %15 {offsets = [0, 256], sizes = [8, 128], strides = [1, 1]} : vector<8x384xf32> to vector<8x128xf32>
    %34 = vector.broadcast %8 : vector<1x128xf32> to vector<8x128xf32>
    %35 = arith.addf %33, %34 : vector<8x128xf32>
    %36 = arith.mulf %23, %35 : vector<8x128xf32>
    %37 = arith.addf %32, %36 : vector<8x128xf32>
    %38 = math.tanh %37 : vector<8x128xf32>
    %cst_16 = arith.constant 1.000000e+00 : f32
    %39 = vector.broadcast %cst_16 : f32 to vector<8x128xf32>
    %40 = arith.subf %39, %31 : vector<8x128xf32>
    %41 = arith.mulf %40, %38 : vector<8x128xf32>
    %42 = arith.mulf %31, %9 : vector<8x128xf32>
    %43 = arith.addf %41, %42 : vector<8x128xf32>
    %c1_i32 = arith.constant 1 : i32
    %c8_i32_17 = arith.constant 8 : i32
    %44 = arith.muli %c1_i32, %c8_i32_17 : i32
    %45 = tpu.assume_multiple %44, 8 : i32
    %46 = arith.index_cast %45 : i32 to index
    %c0_18 = arith.constant 0 : index
    %47 = vector.load %arg10[%46, %c0_18] : memref<64x384xf32, #tpu.memory_space<vmem>>, vector<8x384xf32>
    %48 = arith.truncf %43 : vector<8x128xf32> to vector<8x128xbf16>
    %cst_19 = arith.constant dense<0.000000e+00> : vector<8x384xf32>
    %49 = tpu.matmul %48, %7, %cst_19 {dimension_numbers = #tpu.dot_dimension_numbers<[1], [0], [0], [1], [0, 0, 1, 1], [], []>} : vector<8x128xbf16>, vector<128x384xbf16>, vector<8x384xf32> -> vector<8x384xf32>
    %50 = vector.extract_strided_slice %47 {offsets = [0, 0], sizes = [8, 128], strides = [1, 1]} : vector<8x384xf32> to vector<8x128xf32>
    %51 = vector.extract_strided_slice %49 {offsets = [0, 0], sizes = [8, 128], strides = [1, 1]} : vector<8x384xf32> to vector<8x128xf32>
    %52 = arith.addf %50, %51 : vector<8x128xf32>
    %53 = arith.negf %52 : vector<8x128xf32>
    %54 = math.exp %53 : vector<8x128xf32>
    %cst_20 = arith.constant 1.000000e+00 : f32
    %55 = vector.broadcast %cst_20 : f32 to vector<8x128xf32>
    %56 = arith.addf %55, %54 : vector<8x128xf32>
    %57 = arith.divf %55, %56 : vector<8x128xf32>
    %58 = vector.extract_strided_slice %47 {offsets = [0, 128], sizes = [8, 128], strides = [1, 1]} : vector<8x384xf32> to vector<8x128xf32>
    %59 = vector.extract_strided_slice %49 {offsets = [0, 128], sizes = [8, 128], strides = [1, 1]} : vector<8x384xf32> to vector<8x128xf32>
    %60 = arith.addf %58, %59 : vector<8x128xf32>
    %61 = arith.negf %60 : vector<8x128xf32>
    %62 = math.exp %61 : vector<8x128xf32>
    %cst_21 = arith.constant 1.000000e+00 : f32
    %63 = vector.broadcast %cst_21 : f32 to vector<8x128xf32>
    %64 = arith.addf %63, %62 : vector<8x128xf32>
    %65 = arith.divf %63, %64 : vector<8x128xf32>
    %66 = vector.extract_strided_slice %47 {offsets = [0, 256], sizes = [8, 128], strides = [1, 1]} : vector<8x384xf32> to vector<8x128xf32>
    %67 = vector.extract_strided_slice %49 {offsets = [0, 256], sizes = [8, 128], strides = [1, 1]} : vector<8x384xf32> to vector<8x128xf32>
    %68 = vector.broadcast %8 : vector<1x128xf32> to vector<8x128xf32>
    %69 = arith.addf %67, %68 : vector<8x128xf32>
    %70 = arith.mulf %57, %69 : vector<8x128xf32>
    %71 = arith.addf %66, %70 : vector<8x128xf32>
    %72 = math.tanh %71 : vector<8x128xf32>
    %cst_22 = arith.constant 1.000000e+00 : f32
    %73 = vector.broadcast %cst_22 : f32 to vector<8x128xf32>
    %74 = arith.subf %73, %65 : vector<8x128xf32>
    %75 = arith.mulf %74, %72 : vector<8x128xf32>
    %76 = arith.mulf %65, %43 : vector<8x128xf32>
    %77 = arith.addf %75, %76 : vector<8x128xf32>
    %c2_i32 = arith.constant 2 : i32
    %c8_i32_23 = arith.constant 8 : i32
    %78 = arith.muli %c2_i32, %c8_i32_23 : i32
    %79 = tpu.assume_multiple %78, 8 : i32
    %80 = arith.index_cast %79 : i32 to index
    %c0_24 = arith.constant 0 : index
    %81 = vector.load %arg10[%80, %c0_24] : memref<64x384xf32, #tpu.memory_space<vmem>>, vector<8x384xf32>
    %82 = arith.truncf %77 : vector<8x128xf32> to vector<8x128xbf16>
    %cst_25 = arith.constant dense<0.000000e+00> : vector<8x384xf32>
    %83 = tpu.matmul %82, %7, %cst_25 {dimension_numbers = #tpu.dot_dimension_numbers<[1], [0], [0], [1], [0, 0, 1, 1], [], []>} : vector<8x128xbf16>, vector<128x384xbf16>, vector<8x384xf32> -> vector<8x384xf32>
    %84 = vector.extract_strided_slice %81 {offsets = [0, 0], sizes = [8, 128], strides = [1, 1]} : vector<8x384xf32> to vector<8x128xf32>
    %85 = vector.extract_strided_slice %83 {offsets = [0, 0], sizes = [8, 128], strides = [1, 1]} : vector<8x384xf32> to vector<8x128xf32>
    %86 = arith.addf %84, %85 : vector<8x128xf32>
    %87 = arith.negf %86 : vector<8x128xf32>
    %88 = math.exp %87 : vector<8x128xf32>
    %cst_26 = arith.constant 1.000000e+00 : f32
    %89 = vector.broadcast %cst_26 : f32 to vector<8x128xf32>
    %90 = arith.addf %89, %88 : vector<8x128xf32>
    %91 = arith.divf %89, %90 : vector<8x128xf32>
    %92 = vector.extract_strided_slice %81 {offsets = [0, 128], sizes = [8, 128], strides = [1, 1]} : vector<8x384xf32> to vector<8x128xf32>
    %93 = vector.extract_strided_slice %83 {offsets = [0, 128], sizes = [8, 128], strides = [1, 1]} : vector<8x384xf32> to vector<8x128xf32>
    %94 = arith.addf %92, %93 : vector<8x128xf32>
    %95 = arith.negf %94 : vector<8x128xf32>
    %96 = math.exp %95 : vector<8x128xf32>
    %cst_27 = arith.constant 1.000000e+00 : f32
    %97 = vector.broadcast %cst_27 : f32 to vector<8x128xf32>
    %98 = arith.addf %97, %96 : vector<8x128xf32>
    %99 = arith.divf %97, %98 : vector<8x128xf32>
    %100 = vector.extract_strided_slice %81 {offsets = [0, 256], sizes = [8, 128], strides = [1, 1]} : vector<8x384xf32> to vector<8x128xf32>
    %101 = vector.extract_strided_slice %83 {offsets = [0, 256], sizes = [8, 128], strides = [1, 1]} : vector<8x384xf32> to vector<8x128xf32>
    %102 = vector.broadcast %8 : vector<1x128xf32> to vector<8x128xf32>
    %103 = arith.addf %101, %102 : vector<8x128xf32>
    %104 = arith.mulf %91, %103 : vector<8x128xf32>
    %105 = arith.addf %100, %104 : vector<8x128xf32>
    %106 = math.tanh %105 : vector<8x128xf32>
    %cst_28 = arith.constant 1.000000e+00 : f32
    %107 = vector.broadcast %cst_28 : f32 to vector<8x128xf32>
    %108 = arith.subf %107, %99 : vector<8x128xf32>
    %109 = arith.mulf %108, %106 : vector<8x128xf32>
    %110 = arith.mulf %99, %77 : vector<8x128xf32>
    %111 = arith.addf %109, %110 : vector<8x128xf32>
    %c3_i32 = arith.constant 3 : i32
    %c8_i32_29 = arith.constant 8 : i32
    %112 = arith.muli %c3_i32, %c8_i32_29 : i32
    %113 = tpu.assume_multiple %112, 8 : i32
    %114 = arith.index_cast %113 : i32 to index
    %c0_30 = arith.constant 0 : index
    %115 = vector.load %arg10[%114, %c0_30] : memref<64x384xf32, #tpu.memory_space<vmem>>, vector<8x384xf32>
    %116 = arith.truncf %111 : vector<8x128xf32> to vector<8x128xbf16>
    %cst_31 = arith.constant dense<0.000000e+00> : vector<8x384xf32>
    %117 = tpu.matmul %116, %7, %cst_31 {dimension_numbers = #tpu.dot_dimension_numbers<[1], [0], [0], [1], [0, 0, 1, 1], [], []>} : vector<8x128xbf16>, vector<128x384xbf16>, vector<8x384xf32> -> vector<8x384xf32>
    %118 = vector.extract_strided_slice %115 {offsets = [0, 0], sizes = [8, 128], strides = [1, 1]} : vector<8x384xf32> to vector<8x128xf32>
    %119 = vector.extract_strided_slice %117 {offsets = [0, 0], sizes = [8, 128], strides = [1, 1]} : vector<8x384xf32> to vector<8x128xf32>
    %120 = arith.addf %118, %119 : vector<8x128xf32>
    %121 = arith.negf %120 : vector<8x128xf32>
    %122 = math.exp %121 : vector<8x128xf32>
    %cst_32 = arith.constant 1.000000e+00 : f32
    %123 = vector.broadcast %cst_32 : f32 to vector<8x128xf32>
    %124 = arith.addf %123, %122 : vector<8x128xf32>
    %125 = arith.divf %123, %124 : vector<8x128xf32>
    %126 = vector.extract_strided_slice %115 {offsets = [0, 128], sizes = [8, 128], strides = [1, 1]} : vector<8x384xf32> to vector<8x128xf32>
    %127 = vector.extract_strided_slice %117 {offsets = [0, 128], sizes = [8, 128], strides = [1, 1]} : vector<8x384xf32> to vector<8x128xf32>
    %128 = arith.addf %126, %127 : vector<8x128xf32>
    %129 = arith.negf %128 : vector<8x128xf32>
    %130 = math.exp %129 : vector<8x128xf32>
    %cst_33 = arith.constant 1.000000e+00 : f32
    %131 = vector.broadcast %cst_33 : f32 to vector<8x128xf32>
    %132 = arith.addf %131, %130 : vector<8x128xf32>
    %133 = arith.divf %131, %132 : vector<8x128xf32>
    %134 = vector.extract_strided_slice %115 {offsets = [0, 256], sizes = [8, 128], strides = [1, 1]} : vector<8x384xf32> to vector<8x128xf32>
    %135 = vector.extract_strided_slice %117 {offsets = [0, 256], sizes = [8, 128], strides = [1, 1]} : vector<8x384xf32> to vector<8x128xf32>
    %136 = vector.broadcast %8 : vector<1x128xf32> to vector<8x128xf32>
    %137 = arith.addf %135, %136 : vector<8x128xf32>
    %138 = arith.mulf %125, %137 : vector<8x128xf32>
    %139 = arith.addf %134, %138 : vector<8x128xf32>
    %140 = math.tanh %139 : vector<8x128xf32>
    %cst_34 = arith.constant 1.000000e+00 : f32
    %141 = vector.broadcast %cst_34 : f32 to vector<8x128xf32>
    %142 = arith.subf %141, %133 : vector<8x128xf32>
    %143 = arith.mulf %142, %140 : vector<8x128xf32>
    %144 = arith.mulf %133, %111 : vector<8x128xf32>
    %145 = arith.addf %143, %144 : vector<8x128xf32>
    %c4_i32 = arith.constant 4 : i32
    %c8_i32_35 = arith.constant 8 : i32
    %146 = arith.muli %c4_i32, %c8_i32_35 : i32
    %147 = tpu.assume_multiple %146, 8 : i32
    %148 = arith.index_cast %147 : i32 to index
    %c0_36 = arith.constant 0 : index
    %149 = vector.load %arg10[%148, %c0_36] : memref<64x384xf32, #tpu.memory_space<vmem>>, vector<8x384xf32>
    %150 = arith.truncf %145 : vector<8x128xf32> to vector<8x128xbf16>
    %cst_37 = arith.constant dense<0.000000e+00> : vector<8x384xf32>
    %151 = tpu.matmul %150, %7, %cst_37 {dimension_numbers = #tpu.dot_dimension_numbers<[1], [0], [0], [1], [0, 0, 1, 1], [], []>} : vector<8x128xbf16>, vector<128x384xbf16>, vector<8x384xf32> -> vector<8x384xf32>
    %152 = vector.extract_strided_slice %149 {offsets = [0, 0], sizes = [8, 128], strides = [1, 1]} : vector<8x384xf32> to vector<8x128xf32>
    %153 = vector.extract_strided_slice %151 {offsets = [0, 0], sizes = [8, 128], strides = [1, 1]} : vector<8x384xf32> to vector<8x128xf32>
    %154 = arith.addf %152, %153 : vector<8x128xf32>
    %155 = arith.negf %154 : vector<8x128xf32>
    %156 = math.exp %155 : vector<8x128xf32>
    %cst_38 = arith.constant 1.000000e+00 : f32
    %157 = vector.broadcast %cst_38 : f32 to vector<8x128xf32>
    %158 = arith.addf %157, %156 : vector<8x128xf32>
    %159 = arith.divf %157, %158 : vector<8x128xf32>
    %160 = vector.extract_strided_slice %149 {offsets = [0, 128], sizes = [8, 128], strides = [1, 1]} : vector<8x384xf32> to vector<8x128xf32>
    %161 = vector.extract_strided_slice %151 {offsets = [0, 128], sizes = [8, 128], strides = [1, 1]} : vector<8x384xf32> to vector<8x128xf32>
    %162 = arith.addf %160, %161 : vector<8x128xf32>
    %163 = arith.negf %162 : vector<8x128xf32>
    %164 = math.exp %163 : vector<8x128xf32>
    %cst_39 = arith.constant 1.000000e+00 : f32
    %165 = vector.broadcast %cst_39 : f32 to vector<8x128xf32>
    %166 = arith.addf %165, %164 : vector<8x128xf32>
    %167 = arith.divf %165, %166 : vector<8x128xf32>
    %168 = vector.extract_strided_slice %149 {offsets = [0, 256], sizes = [8, 128], strides = [1, 1]} : vector<8x384xf32> to vector<8x128xf32>
    %169 = vector.extract_strided_slice %151 {offsets = [0, 256], sizes = [8, 128], strides = [1, 1]} : vector<8x384xf32> to vector<8x128xf32>
    %170 = vector.broadcast %8 : vector<1x128xf32> to vector<8x128xf32>
    %171 = arith.addf %169, %170 : vector<8x128xf32>
    %172 = arith.mulf %159, %171 : vector<8x128xf32>
    %173 = arith.addf %168, %172 : vector<8x128xf32>
    %174 = math.tanh %173 : vector<8x128xf32>
    %cst_40 = arith.constant 1.000000e+00 : f32
    %175 = vector.broadcast %cst_40 : f32 to vector<8x128xf32>
    %176 = arith.subf %175, %167 : vector<8x128xf32>
    %177 = arith.mulf %176, %174 : vector<8x128xf32>
    %178 = arith.mulf %167, %145 : vector<8x128xf32>
    %179 = arith.addf %177, %178 : vector<8x128xf32>
    %c5_i32 = arith.constant 5 : i32
    %c8_i32_41 = arith.constant 8 : i32
    %180 = arith.muli %c5_i32, %c8_i32_41 : i32
    %181 = tpu.assume_multiple %180, 8 : i32
    %182 = arith.index_cast %181 : i32 to index
    %c0_42 = arith.constant 0 : index
    %183 = vector.load %arg10[%182, %c0_42] : memref<64x384xf32, #tpu.memory_space<vmem>>, vector<8x384xf32>
    %184 = arith.truncf %179 : vector<8x128xf32> to vector<8x128xbf16>
    %cst_43 = arith.constant dense<0.000000e+00> : vector<8x384xf32>
    %185 = tpu.matmul %184, %7, %cst_43 {dimension_numbers = #tpu.dot_dimension_numbers<[1], [0], [0], [1], [0, 0, 1, 1], [], []>} : vector<8x128xbf16>, vector<128x384xbf16>, vector<8x384xf32> -> vector<8x384xf32>
    %186 = vector.extract_strided_slice %183 {offsets = [0, 0], sizes = [8, 128], strides = [1, 1]} : vector<8x384xf32> to vector<8x128xf32>
    %187 = vector.extract_strided_slice %185 {offsets = [0, 0], sizes = [8, 128], strides = [1, 1]} : vector<8x384xf32> to vector<8x128xf32>
    %188 = arith.addf %186, %187 : vector<8x128xf32>
    %189 = arith.negf %188 : vector<8x128xf32>
    %190 = math.exp %189 : vector<8x128xf32>
    %cst_44 = arith.constant 1.000000e+00 : f32
    %191 = vector.broadcast %cst_44 : f32 to vector<8x128xf32>
    %192 = arith.addf %191, %190 : vector<8x128xf32>
    %193 = arith.divf %191, %192 : vector<8x128xf32>
    %194 = vector.extract_strided_slice %183 {offsets = [0, 128], sizes = [8, 128], strides = [1, 1]} : vector<8x384xf32> to vector<8x128xf32>
    %195 = vector.extract_strided_slice %185 {offsets = [0, 128], sizes = [8, 128], strides = [1, 1]} : vector<8x384xf32> to vector<8x128xf32>
    %196 = arith.addf %194, %195 : vector<8x128xf32>
    %197 = arith.negf %196 : vector<8x128xf32>
    %198 = math.exp %197 : vector<8x128xf32>
    %cst_45 = arith.constant 1.000000e+00 : f32
    %199 = vector.broadcast %cst_45 : f32 to vector<8x128xf32>
    %200 = arith.addf %199, %198 : vector<8x128xf32>
    %201 = arith.divf %199, %200 : vector<8x128xf32>
    %202 = vector.extract_strided_slice %183 {offsets = [0, 256], sizes = [8, 128], strides = [1, 1]} : vector<8x384xf32> to vector<8x128xf32>
    %203 = vector.extract_strided_slice %185 {offsets = [0, 256], sizes = [8, 128], strides = [1, 1]} : vector<8x384xf32> to vector<8x128xf32>
    %204 = vector.broadcast %8 : vector<1x128xf32> to vector<8x128xf32>
    %205 = arith.addf %203, %204 : vector<8x128xf32>
    %206 = arith.mulf %193, %205 : vector<8x128xf32>
    %207 = arith.addf %202, %206 : vector<8x128xf32>
    %208 = math.tanh %207 : vector<8x128xf32>
    %cst_46 = arith.constant 1.000000e+00 : f32
    %209 = vector.broadcast %cst_46 : f32 to vector<8x128xf32>
    %210 = arith.subf %209, %201 : vector<8x128xf32>
    %211 = arith.mulf %210, %208 : vector<8x128xf32>
    %212 = arith.mulf %201, %179 : vector<8x128xf32>
    %213 = arith.addf %211, %212 : vector<8x128xf32>
    %c6_i32 = arith.constant 6 : i32
    %c8_i32_47 = arith.constant 8 : i32
    %214 = arith.muli %c6_i32, %c8_i32_47 : i32
    %215 = tpu.assume_multiple %214, 8 : i32
    %216 = arith.index_cast %215 : i32 to index
    %c0_48 = arith.constant 0 : index
    %217 = vector.load %arg10[%216, %c0_48] : memref<64x384xf32, #tpu.memory_space<vmem>>, vector<8x384xf32>
    %218 = arith.truncf %213 : vector<8x128xf32> to vector<8x128xbf16>
    %cst_49 = arith.constant dense<0.000000e+00> : vector<8x384xf32>
    %219 = tpu.matmul %218, %7, %cst_49 {dimension_numbers = #tpu.dot_dimension_numbers<[1], [0], [0], [1], [0, 0, 1, 1], [], []>} : vector<8x128xbf16>, vector<128x384xbf16>, vector<8x384xf32> -> vector<8x384xf32>
    %220 = vector.extract_strided_slice %217 {offsets = [0, 0], sizes = [8, 128], strides = [1, 1]} : vector<8x384xf32> to vector<8x128xf32>
    %221 = vector.extract_strided_slice %219 {offsets = [0, 0], sizes = [8, 128], strides = [1, 1]} : vector<8x384xf32> to vector<8x128xf32>
    %222 = arith.addf %220, %221 : vector<8x128xf32>
    %223 = arith.negf %222 : vector<8x128xf32>
    %224 = math.exp %223 : vector<8x128xf32>
    %cst_50 = arith.constant 1.000000e+00 : f32
    %225 = vector.broadcast %cst_50 : f32 to vector<8x128xf32>
    %226 = arith.addf %225, %224 : vector<8x128xf32>
    %227 = arith.divf %225, %226 : vector<8x128xf32>
    %228 = vector.extract_strided_slice %217 {offsets = [0, 128], sizes = [8, 128], strides = [1, 1]} : vector<8x384xf32> to vector<8x128xf32>
    %229 = vector.extract_strided_slice %219 {offsets = [0, 128], sizes = [8, 128], strides = [1, 1]} : vector<8x384xf32> to vector<8x128xf32>
    %230 = arith.addf %228, %229 : vector<8x128xf32>
    %231 = arith.negf %230 : vector<8x128xf32>
    %232 = math.exp %231 : vector<8x128xf32>
    %cst_51 = arith.constant 1.000000e+00 : f32
    %233 = vector.broadcast %cst_51 : f32 to vector<8x128xf32>
    %234 = arith.addf %233, %232 : vector<8x128xf32>
    %235 = arith.divf %233, %234 : vector<8x128xf32>
    %236 = vector.extract_strided_slice %217 {offsets = [0, 256], sizes = [8, 128], strides = [1, 1]} : vector<8x384xf32> to vector<8x128xf32>
    %237 = vector.extract_strided_slice %219 {offsets = [0, 256], sizes = [8, 128], strides = [1, 1]} : vector<8x384xf32> to vector<8x128xf32>
    %238 = vector.broadcast %8 : vector<1x128xf32> to vector<8x128xf32>
    %239 = arith.addf %237, %238 : vector<8x128xf32>
    %240 = arith.mulf %227, %239 : vector<8x128xf32>
    %241 = arith.addf %236, %240 : vector<8x128xf32>
    %242 = math.tanh %241 : vector<8x128xf32>
    %cst_52 = arith.constant 1.000000e+00 : f32
    %243 = vector.broadcast %cst_52 : f32 to vector<8x128xf32>
    %244 = arith.subf %243, %235 : vector<8x128xf32>
    %245 = arith.mulf %244, %242 : vector<8x128xf32>
    %246 = arith.mulf %235, %213 : vector<8x128xf32>
    %247 = arith.addf %245, %246 : vector<8x128xf32>
    %c7_i32 = arith.constant 7 : i32
    %c8_i32_53 = arith.constant 8 : i32
    %248 = arith.muli %c7_i32, %c8_i32_53 : i32
    %249 = tpu.assume_multiple %248, 8 : i32
    %250 = arith.index_cast %249 : i32 to index
    %c0_54 = arith.constant 0 : index
    %251 = vector.load %arg10[%250, %c0_54] : memref<64x384xf32, #tpu.memory_space<vmem>>, vector<8x384xf32>
    %252 = arith.truncf %247 : vector<8x128xf32> to vector<8x128xbf16>
    %cst_55 = arith.constant dense<0.000000e+00> : vector<8x384xf32>
    %253 = tpu.matmul %252, %7, %cst_55 {dimension_numbers = #tpu.dot_dimension_numbers<[1], [0], [0], [1], [0, 0, 1, 1], [], []>} : vector<8x128xbf16>, vector<128x384xbf16>, vector<8x384xf32> -> vector<8x384xf32>
    %254 = vector.extract_strided_slice %251 {offsets = [0, 0], sizes = [8, 128], strides = [1, 1]} : vector<8x384xf32> to vector<8x128xf32>
    %255 = vector.extract_strided_slice %253 {offsets = [0, 0], sizes = [8, 128], strides = [1, 1]} : vector<8x384xf32> to vector<8x128xf32>
    %256 = arith.addf %254, %255 : vector<8x128xf32>
    %257 = arith.negf %256 : vector<8x128xf32>
    %258 = math.exp %257 : vector<8x128xf32>
    %cst_56 = arith.constant 1.000000e+00 : f32
    %259 = vector.broadcast %cst_56 : f32 to vector<8x128xf32>
    %260 = arith.addf %259, %258 : vector<8x128xf32>
    %261 = arith.divf %259, %260 : vector<8x128xf32>
    %262 = vector.extract_strided_slice %251 {offsets = [0, 128], sizes = [8, 128], strides = [1, 1]} : vector<8x384xf32> to vector<8x128xf32>
    %263 = vector.extract_strided_slice %253 {offsets = [0, 128], sizes = [8, 128], strides = [1, 1]} : vector<8x384xf32> to vector<8x128xf32>
    %264 = arith.addf %262, %263 : vector<8x128xf32>
    %265 = arith.negf %264 : vector<8x128xf32>
    %266 = math.exp %265 : vector<8x128xf32>
    %cst_57 = arith.constant 1.000000e+00 : f32
    %267 = vector.broadcast %cst_57 : f32 to vector<8x128xf32>
    %268 = arith.addf %267, %266 : vector<8x128xf32>
    %269 = arith.divf %267, %268 : vector<8x128xf32>
    %270 = vector.extract_strided_slice %251 {offsets = [0, 256], sizes = [8, 128], strides = [1, 1]} : vector<8x384xf32> to vector<8x128xf32>
    %271 = vector.extract_strided_slice %253 {offsets = [0, 256], sizes = [8, 128], strides = [1, 1]} : vector<8x384xf32> to vector<8x128xf32>
    %272 = vector.broadcast %8 : vector<1x128xf32> to vector<8x128xf32>
    %273 = arith.addf %271, %272 : vector<8x128xf32>
    %274 = arith.mulf %261, %273 : vector<8x128xf32>
    %275 = arith.addf %270, %274 : vector<8x128xf32>
    %276 = math.tanh %275 : vector<8x128xf32>
    %cst_58 = arith.constant 1.000000e+00 : f32
    %277 = vector.broadcast %cst_58 : f32 to vector<8x128xf32>
    %278 = arith.subf %277, %269 : vector<8x128xf32>
    %279 = arith.mulf %278, %276 : vector<8x128xf32>
    %280 = arith.mulf %269, %247 : vector<8x128xf32>
    %281 = arith.addf %279, %280 : vector<8x128xf32>
    %c8_i32_59 = arith.constant 8 : i32
    %282 = arith.truncf %281 : vector<8x128xf32> to vector<8x128xbf16>
    %c0_60 = arith.constant 0 : index
    %c0_61 = arith.constant 0 : index
    %283 = vector.load %arg5[%c0_60, %c0_61] : memref<128x128xbf16, #tpu.memory_space<vmem>>, vector<128x128xbf16>
    %cst_62 = arith.constant dense<0.000000e+00> : vector<8x128xf32>
    %284 = tpu.matmul %282, %283, %cst_62 {dimension_numbers = #tpu.dot_dimension_numbers<[1], [0], [0], [1], [0, 0, 1, 1], [], []>} : vector<8x128xbf16>, vector<128x128xbf16>, vector<8x128xf32> -> vector<8x128xf32>
    %c0_63 = arith.constant 0 : index
    %c0_64 = arith.constant 0 : index
    %285 = vector.load %arg6[%c0_63, %c0_64] : memref<1x128xf32, #tpu.memory_space<vmem>>, vector<1x128xf32>
    %286 = vector.broadcast %285 : vector<1x128xf32> to vector<8x128xf32>
    %287 = arith.addf %284, %286 : vector<8x128xf32>
    %cst_65 = arith.constant 0.000000e+00 : f32
    %288 = vector.broadcast %cst_65 : f32 to vector<8x128xf32>
    %289 = arith.maximumf %287, %288 : vector<8x128xf32>
    %290 = arith.truncf %289 : vector<8x128xf32> to vector<8x128xbf16>
    %c0_66 = arith.constant 0 : index
    %c0_67 = arith.constant 0 : index
    %291 = vector.load %arg7[%c0_66, %c0_67] : memref<128x128xbf16, #tpu.memory_space<vmem>>, vector<128x128xbf16>
    %cst_68 = arith.constant dense<0.000000e+00> : vector<8x128xf32>
    %292 = tpu.matmul %290, %291, %cst_68 {dimension_numbers = #tpu.dot_dimension_numbers<[1], [0], [0], [1], [0, 0, 1, 1], [], []>} : vector<8x128xbf16>, vector<128x128xbf16>, vector<8x128xf32> -> vector<8x128xf32>
    %c0_69 = arith.constant 0 : index
    %c0_70 = arith.constant 0 : index
    %293 = vector.load %arg8[%c0_69, %c0_70] : memref<1x128xf32, #tpu.memory_space<vmem>>, vector<1x128xf32>
    %294 = vector.broadcast %293 : vector<1x128xf32> to vector<8x128xf32>
    %295 = arith.addf %292, %294 : vector<8x128xf32>
    %c0_71 = arith.constant 0 : index
    %c0_72 = arith.constant 0 : index
    %296 = vector.load %arg9[%c0_71, %c0_72] : memref<8x128xf32, #tpu.memory_space<vmem>>, vector<8x128xf32>
    tpu.vector_store %arg9[%c0_71, %c0_72], %295 {strides = array<i32>} : memref<8x128xf32, #tpu.memory_space<vmem>>, vector<8x128xf32>,
    return
  }
}

</mosaic_0001>

<llo_original>
// kernel: classifier_forward.1
$region0: #{classifier_forward.1}
  #allocation0 [shape = 'u32[]', space=smem, size = 0x4, offset = 0x4, fixed_abs, tag = 'smem constant byte address 0x4 - core index']
  #allocation1 [shape = 'u32[144,128]{1,0:T(1,128)}', space=vmem, size = 0x12000, scoped, tag = 'internal scratch']
  #allocation2 [shape = 'f32[64,384]{1,0:T(8,128)}', space=vmem, size = 0x18000, scoped, tag = 'scratch operand']
  %s0 = inlined_call_operand.vmem [shape: bf16[64,128], index: 0, kind: input, shape index: {}]
  %s1 = inlined_call_operand.vmem [shape: bf16[128,384], index: 1, kind: input, shape index: {}]
  %s2 = inlined_call_operand.vmem [shape: bf16[128,384], index: 2, kind: input, shape index: {}]
  %s3 = inlined_call_operand.vmem [shape: f32[1,384], index: 3, kind: input, shape index: {}]
  %s4 = inlined_call_operand.vmem [shape: f32[1,128], index: 4, kind: input, shape index: {}]
  %s5 = inlined_call_operand.vmem [shape: bf16[128,128], index: 5, kind: input, shape index: {}]
  %s6 = inlined_call_operand.vmem [shape: f32[1,128], index: 6, kind: input, shape index: {}]
  %s7 = inlined_call_operand.vmem [shape: bf16[128,128], index: 7, kind: input, shape index: {}]
  %s8 = inlined_call_operand.vmem [shape: f32[1,128], index: 8, kind: input, shape index: {}]
  %s9 = inlined_call_operand.vmem [shape: f32[8,128], index: 9, kind: output, shape index: {}]
  %s10 = sld [smem:[#allocation0]]
  $region46: #{classifier_forward.1} parent=0
    _
  %s12 = ssub.s32 1, %s10
  %s13 = scalar_select 0, %s12, %s10
  // Predicated region
  $region2: #{classifier_forward.1} parent=0 // pred_check
    _
  $region3: #{classifier_forward.1} parent=0 // pred_check_branch
    %15 = sbr.rel (0) target = $region5
  $region4: #{classifier_forward.1} parent=0 // pred_region
    _
  $region5: #{classifier_forward.1} parent=0 // pred_fallthru
    _
  // Predicated region
  $region6: #{classifier_forward.1} parent=0 // pred_check
    _
  $region7: #{classifier_forward.1} parent=0 // pred_check_branch
    %17 = sbr.rel (0) target = $region9
  $region8: #{classifier_forward.1} parent=0 // pred_region
    _
  $region9: #{classifier_forward.1} parent=0 // pred_fallthru
    _
  // Predicated region
  $region10: #{classifier_forward.1} parent=0 // pred_check
    _
  $region11: #{classifier_forward.1} parent=0 // pred_check_branch
    %19 = sbr.rel (0) target = $region13
  $region12: #{classifier_forward.1} parent=0 // pred_region
    _
  $region13: #{classifier_forward.1} parent=0 // pred_fallthru
    _
  // Predicated region
  $region14: #{classifier_forward.1} parent=0 // pred_check
    _
  $region15: #{classifier_forward.1} parent=0 // pred_check_branch
    %21 = sbr.rel (0) target = $region17
  $region16: #{classifier_forward.1} parent=0 // pred_region
    _
  $region17: #{classifier_forward.1} parent=0 // pred_fallthru
    _
  // Predicated region
  $region18: #{classifier_forward.1} parent=0 // pred_check
    _
  $region19: #{classifier_forward.1} parent=0 // pred_check_branch
    %23 = sbr.rel (0) target = $region21
  $region20: #{classifier_forward.1} parent=0 // pred_region
    _
  $region21: #{classifier_forward.1} parent=0 // pred_fallthru
    _
  // Predicated region
  $region22: #{classifier_forward.1} parent=0 // pred_check
    _
  $region23: #{classifier_forward.1} parent=0 // pred_check_branch
    %25 = sbr.rel (0) target = $region25
  $region24: #{classifier_forward.1} parent=0 // pred_region
    _
  $region25: #{classifier_forward.1} parent=0 // pred_fallthru
    _
  // Predicated region
  $region26: #{classifier_forward.1} parent=0 // pred_check
    _
  $region27: #{classifier_forward.1} parent=0 // pred_check_branch
    %27 = sbr.rel (0) target = $region29
  $region28: #{classifier_forward.1} parent=0 // pred_region
    _
  $region29: #{classifier_forward.1} parent=0 // pred_fallthru
    _
  // Predicated region
  $region30: #{classifier_forward.1} parent=0 // pred_check
    _
  $region31: #{classifier_forward.1} parent=0 // pred_check_branch
    %29 = sbr.rel (0) target = $region33
  $region32: #{classifier_forward.1} parent=0 // pred_region
    _
  $region33: #{classifier_forward.1} parent=0 // pred_fallthru
    _
  // Predicated region
  $region34: #{classifier_forward.1} parent=0 // pred_check
    _
  $region35: #{classifier_forward.1} parent=0 // pred_check_branch
    %31 = sbr.rel (0) target = $region37
  $region36: #{classifier_forward.1} parent=0 // pred_region
    _
  $region37: #{classifier_forward.1} parent=0 // pred_fallthru
    _
  %v33 = vld [vmem:[%s0] sm:$0xf]
  %v34 = vld [vmem:[%s0 + $0x4] sm:$0xf]
  %v35 = vld [vmem:[%s0 + $0x8] sm:$0xf]
  %v36 = vld [vmem:[%s0 + $0xc] sm:$0xf]
  %v37 = vld [vmem:[%s0 + $0x10] sm:$0xf]
  %v38 = vld [vmem:[%s0 + $0x14] sm:$0xf]
  %v39 = vld [vmem:[%s0 + $0x18] sm:$0xf]
  %v40 = vld [vmem:[%s0 + $0x1c] sm:$0xf]
  %v41 = vld [vmem:[%s1] sm:$0xff]
  %v42 = vld [vmem:[%s1 + $0x8] sm:$0xf]
  %v43 = vld [vmem:[%s1 + $0xc] sm:$0xff]
  %v44 = vld [vmem:[%s1 + $0x14] sm:$0xf]
  %v45 = vld [vmem:[%s1 + $0x18] sm:$0xff]
  %v46 = vld [vmem:[%s1 + $0x20] sm:$0xf]
  %v47 = vld [vmem:[%s1 + $0x24] sm:$0xff]
  %v48 = vld [vmem:[%s1 + $0x2c] sm:$0xf]
  %v49 = vld [vmem:[%s1 + $0x30] sm:$0xff]
  %v50 = vld [vmem:[%s1 + $0x38] sm:$0xf]
  %v51 = vld [vmem:[%s1 + $0x3c] sm:$0xff]
  %v52 = vld [vmem:[%s1 + $0x44] sm:$0xf]
  %v53 = vld [vmem:[%s1 + $0x48] sm:$0xff]
  %v54 = vld [vmem:[%s1 + $0x50] sm:$0xf]
  %v55 = vld [vmem:[%s1 + $0x54] sm:$0xff]
  %v56 = vld [vmem:[%s1 + $0x5c] sm:$0xf]
  %v57 = vld [vmem:[%s1 + $0x60] sm:$0xff]
  %v58 = vld [vmem:[%s1 + $0x68] sm:$0xf]
  %v59 = vld [vmem:[%s1 + $0x6c] sm:$0xff]
  %v60 = vld [vmem:[%s1 + $0x74] sm:$0xf]
  %v61 = vld [vmem:[%s1 + $0x78] sm:$0xff]
  %v62 = vld [vmem:[%s1 + $0x80] sm:$0xf]
  %v63 = vld [vmem:[%s1 + $0x84] sm:$0xff]
  %v64 = vld [vmem:[%s1 + $0x8c] sm:$0xf]
  %v65 = vld [vmem:[%s1 + $0x90] sm:$0xff]
  %v66 = vld [vmem:[%s1 + $0x98] sm:$0xf]
  %v67 = vld [vmem:[%s1 + $0x9c] sm:$0xff]
  %v68 = vld [vmem:[%s1 + $0xa4] sm:$0xf]
  %v69 = vld [vmem:[%s1 + $0xa8] sm:$0xff]
  %v70 = vld [vmem:[%s1 + $0xb0] sm:$0xf]
  %v71 = vld [vmem:[%s1 + $0xb4] sm:$0xff]
  %v72 = vld [vmem:[%s1 + $0xbc] sm:$0xf]
  %v73 = vld [vmem:[%s3] sm:$0x7]
  %v75 = vlaneseq
  %v76 = vshrl.u32 %v75, 7
  %v77 = vsub.s32 0, %v76
  %v78 = vrot.slane %v73, %v77
  %v79 = vlaneseq
  %v80 = vshrl.u32 %v79, 7
  %v81 = vsub.s32 1, %v80
  %v82 = vrot.slane %v73, %v81
  %v83 = vlaneseq
  %v84 = vshrl.u32 %v83, 7
  %v85 = vsub.s32 2, %v84
  %v86 = vrot.slane %v73, %v85
  %v98 = vunpack.c.l.b16 %v33
  %v99 = vunpack.c.l.b16 %v34
  %v100 = vunpack.c.l.b16 %v35
  %v101 = vunpack.c.l.b16 %v36
  %v102 = vunpack.c.l.b16 %v37
  %v103 = vunpack.c.l.b16 %v38
  %v104 = vunpack.c.l.b16 %v39
  %v105 = vunpack.c.l.b16 %v40
  %v106 = vpack.c.b16 %v99, %v98
  %v107 = vpack.c.b16 %v101, %v100
  %v108 = vpack.c.b16 %v103, %v102
  %v109 = vpack.c.b16 %v105, %v104
  %v146 = vunpack.c.l.b16 %v41
  %v147 = vunpack.c.h.b16 %v41
  %v148 = vunpack.c.l.b16 %v42
  %v149 = vunpack.c.l.b16 %v43
  %v150 = vunpack.c.h.b16 %v43
  %v151 = vunpack.c.l.b16 %v44
  %v152 = vunpack.c.l.b16 %v45
  %v153 = vunpack.c.h.b16 %v45
  %v154 = vunpack.c.l.b16 %v46
  %v155 = vunpack.c.l.b16 %v47
  %v156 = vunpack.c.h.b16 %v47
  %v157 = vunpack.c.l.b16 %v48
  %v158 = vunpack.c.l.b16 %v49
  %v159 = vunpack.c.h.b16 %v49
  %v160 = vunpack.c.l.b16 %v50
  %v161 = vunpack.c.l.b16 %v51
  %v162 = vunpack.c.h.b16 %v51
  %v163 = vunpack.c.l.b16 %v52
  %v164 = vunpack.c.l.b16 %v53
  %v165 = vunpack.c.h.b16 %v53
  %v166 = vunpack.c.l.b16 %v54
  %v167 = vunpack.c.l.b16 %v55
  %v168 = vunpack.c.h.b16 %v55
  %v169 = vunpack.c.l.b16 %v56
  %v170 = vunpack.c.l.b16 %v57
  %v171 = vunpack.c.h.b16 %v57
  %v172 = vunpack.c.l.b16 %v58
  %v173 = vunpack.c.l.b16 %v59
  %v174 = vunpack.c.h.b16 %v59
  %v175 = vunpack.c.l.b16 %v60
  %v176 = vunpack.c.l.b16 %v61
  %v177 = vunpack.c.h.b16 %v61
  %v178 = vunpack.c.l.b16 %v62
  %v179 = vunpack.c.l.b16 %v63
  %v180 = vunpack.c.h.b16 %v63
  %v181 = vunpack.c.l.b16 %v64
  %v182 = vunpack.c.l.b16 %v65
  %v183 = vunpack.c.h.b16 %v65
  %v184 = vunpack.c.l.b16 %v66
  %v185 = vunpack.c.l.b16 %v67
  %v186 = vunpack.c.h.b16 %v67
  %v187 = vunpack.c.l.b16 %v68
  %v188 = vunpack.c.l.b16 %v69
  %v189 = vunpack.c.h.b16 %v69
  %v190 = vunpack.c.l.b16 %v70
  %v191 = vunpack.c.l.b16 %v71
  %v192 = vunpack.c.h.b16 %v71
  %v193 = vunpack.c.l.b16 %v72
  %v194 = vpack.c.b16 %v149, %v146
  %v195 = vpack.c.b16 %v150, %v147
  %v196 = vpack.c.b16 %v151, %v148
  %v197 = vpack.c.b16 %v155, %v152
  %v198 = vpack.c.b16 %v156, %v153
  %v199 = vpack.c.b16 %v157, %v154
  %v200 = vpack.c.b16 %v161, %v158
  %v201 = vpack.c.b16 %v162, %v159
  %v202 = vpack.c.b16 %v163, %v160
  %v203 = vpack.c.b16 %v167, %v164
  %v204 = vpack.c.b16 %v168, %v165
  %v205 = vpack.c.b16 %v169, %v166
  %v206 = vpack.c.b16 %v173, %v170
  %v207 = vpack.c.b16 %v174, %v171
  %v208 = vpack.c.b16 %v175, %v172
  %v209 = vpack.c.b16 %v179, %v176
  %v210 = vpack.c.b16 %v180, %v177
  %v211 = vpack.c.b16 %v181, %v178
  %v212 = vpack.c.b16 %v185, %v182
  %v213 = vpack.c.b16 %v186, %v183
  %v214 = vpack.c.b16 %v187, %v184
  %v215 = vpack.c.b16 %v191, %v188
  %v216 = vpack.c.b16 %v192, %v189
  %v217 = vpack.c.b16 %v193, %v190
  %242 = vmatprep.subr.bf16.mxu0 %v195
  %243 = vmatpush1.bf16.msra.mxu0 %v194
  %244 = vmatprep.subr.bf16.mxu0 %v198
  %245 = vmatpush1.bf16.msra.mxu0 %v197
  %246 = vmatprep.subr.bf16.mxu0 %v201
  %247 = vmatpush1.bf16.msra.mxu0 %v200
  %248 = vmatprep.subr.bf16.mxu0 %v204
  %249 = vmatpush1.bf16.msra.mxu0 %v203
  %250 = vmatprep.subr.bf16.mxu0 %v207
  %251 = vmatpush1.bf16.msra.mxu0 %v206
  %252 = vmatprep.subr.bf16.mxu0 %v210
  %253 = vmatpush1.bf16.msra.mxu0 %v209
  %254 = vmatprep.subr.bf16.mxu0 %v213
  %255 = vmatpush1.bf16.msra.mxu0 %v212
  %256 = vmatprep.subr.bf16.mxu0 %v216
  %257 = vmatpush1.bf16.msra.mxu0 %v215
  %258 = vmatprep.subr.bf16.mxu0 0
  %259 = vmatpush1.bf16.msra.mxu0 0
  %260 = vmatprep.subr.bf16.mxu0 0
  %261 = vmatpush1.bf16.msra.mxu0 0
  %262 = vmatprep.subr.bf16.mxu0 0
  %263 = vmatpush1.bf16.msra.mxu0 0
  %264 = vmatprep.subr.bf16.mxu0 0
  %265 = vmatpush1.bf16.msra.mxu0 0
  %266 = vmatprep.subr.bf16.mxu0 0
  %267 = vmatpush1.bf16.msra.mxu0 0
  %268 = vmatprep.subr.bf16.mxu0 0
  %269 = vmatpush1.bf16.msra.mxu0 0
  %270 = vmatprep.subr.bf16.mxu0 0
  %271 = vmatpush1.bf16.msra.mxu0 0
  %272 = vmatprep.subr.bf16.mxu0 0
  %273 = vmatpush1.bf16.msra.mxu0 0
  %274 = vmatprep.mubr.bf16.mxu0 0
  %275 = vmatmul.mubr.bf16.gmra.mrb[0].mxu0 %v106
  %v276 = vpop.f32.mrb[0].mxu0
  %v277 = vadd.f32 %v78, %v276
  %v278 = vpop.f32.mrb[0].mxu0
  %v279 = vadd.f32 %v82, %v278
  %v280 = vpop.f32.mrb[0].mxu0
  %v281 = vadd.f32 %v78, %v280
  %v282 = vpop.f32.mrb[0].mxu0
  %v283 = vadd.f32 %v82, %v282
  %284 = vmatprep.mubr.bf16.mxu0 0
  %285 = vmatmul.mubr.bf16.gmra.mrb[0].mxu0 %v107
  %v286 = vpop.f32.mrb[0].mxu0
  %v287 = vadd.f32 %v78, %v286
  %v288 = vpop.f32.mrb[0].mxu0
  %v289 = vadd.f32 %v82, %v288
  %v290 = vpop.f32.mrb[0].mxu0
  %v291 = vadd.f32 %v78, %v290
  %v292 = vpop.f32.mrb[0].mxu0
  %v293 = vadd.f32 %v82, %v292
  %294 = vmatprep.mubr.bf16.mxu0 0
  %295 = vmatmul.mubr.bf16.gmra.mrb[0].mxu0 %v108
  %v296 = vpop.f32.mrb[0].mxu0
  %v297 = vadd.f32 %v78, %v296
  %v298 = vpop.f32.mrb[0].mxu0
  %v299 = vadd.f32 %v82, %v298
  %v300 = vpop.f32.mrb[0].mxu0
  %v301 = vadd.f32 %v78, %v300
  %v302 = vpop.f32.mrb[0].mxu0
  %v303 = vadd.f32 %v82, %v302
  %304 = vmatprep.mubr.bf16.mxu0 0
  %305 = vmatmul.mubr.bf16.gmra.mrb[0].mxu0 %v109
  %v306 = vpop.f32.mrb[0].mxu0
  %v307 = vadd.f32 %v78, %v306
  %v308 = vpop.f32.mrb[0].mxu0
  %v309 = vadd.f32 %v82, %v308
  %v310 = vpop.f32.mrb[0].mxu0
  %v311 = vadd.f32 %v78, %v310
  %v312 = vpop.f32.mrb[0].mxu0
  %v313 = vadd.f32 %v82, %v312
  %314 = vdwg.mxu0
  %315 = vmatprep.subr.bf16.mxu0 0
  %316 = vmatpush1.bf16.msra.mxu0 %v196
  %317 = vmatprep.subr.bf16.mxu0 0
  %318 = vmatpush1.bf16.msra.mxu0 %v199
  %319 = vmatprep.subr.bf16.mxu0 0
  %320 = vmatpush1.bf16.msra.mxu0 %v202
  %321 = vmatprep.subr.bf16.mxu0 0
  %322 = vmatpush1.bf16.msra.mxu0 %v205
  %323 = vmatprep.subr.bf16.mxu0 0
  %324 = vmatpush1.bf16.msra.mxu0 %v208
  %325 = vmatprep.subr.bf16.mxu0 0
  %326 = vmatpush1.bf16.msra.mxu0 %v211
  %327 = vmatprep.subr.bf16.mxu0 0
  %328 = vmatpush1.bf16.msra.mxu0 %v214
  %329 = vmatprep.subr.bf16.mxu0 0
  %330 = vmatpush1.bf16.msra.mxu0 %v217
  %331 = vmatprep.subr.bf16.mxu0 0
  %332 = vmatpush1.bf16.msra.mxu0 0
  %333 = vmatprep.subr.bf16.mxu0 0
  %334 = vmatpush1.bf16.msra.mxu0 0
  %335 = vmatprep.subr.bf16.mxu0 0
  %336 = vmatpush1.bf16.msra.mxu0 0
  %337 = vmatprep.subr.bf16.mxu0 0
  %338 = vmatpush1.bf16.msra.mxu0 0
  %339 = vmatprep.subr.bf16.mxu0 0
  %340 = vmatpush1.bf16.msra.mxu0 0
  %341 = vmatprep.subr.bf16.mxu0 0
  %342 = vmatpush1.bf16.msra.mxu0 0
  %343 = vmatprep.subr.bf16.mxu0 0
  %344 = vmatpush1.bf16.msra.mxu0 0
  %345 = vmatprep.subr.bf16.mxu0 0
  %346 = vmatpush1.bf16.msra.mxu0 0
  %347 = vmatprep.mubr.bf16.mxu0 0
  %348 = vmatmul.mubr.bf16.gmra.mrb[0].mxu0 %v106
  %v349 = vpop.f32.mrb[0].mxu0
  %v350 = vadd.f32 %v86, %v349
  %v351 = vpop.f32.mrb[0].mxu0
  %v352 = vpop.f32.mrb[0].mxu0
  %v353 = vadd.f32 %v86, %v352
  %v354 = vpop.f32.mrb[0].mxu0
  %355 = vmatprep.mubr.bf16.mxu0 0
  %356 = vmatmul.mubr.bf16.gmra.mrb[0].mxu0 %v107
  %v357 = vpop.f32.mrb[0].mxu0
  %v358 = vadd.f32 %v86, %v357
  %v359 = vpop.f32.mrb[0].mxu0
  %v360 = vpop.f32.mrb[0].mxu0
  %v361 = vadd.f32 %v86, %v360
  %v362 = vpop.f32.mrb[0].mxu0
  %363 = vmatprep.mubr.bf16.mxu0 0
  %364 = vmatmul.mubr.bf16.gmra.mrb[0].mxu0 %v108
  %v365 = vpop.f32.mrb[0].mxu0
  %v366 = vadd.f32 %v86, %v365
  %v367 = vpop.f32.mrb[0].mxu0
  %v368 = vpop.f32.mrb[0].mxu0
  %v369 = vadd.f32 %v86, %v368
  %v370 = vpop.f32.mrb[0].mxu0
  %371 = vmatprep.mubr.bf16.mxu0 0
  %372 = vmatmul.mubr.bf16.gmra.mrb[0].mxu0 %v109
  %v373 = vpop.f32.mrb[0].mxu0
  %v374 = vadd.f32 %v86, %v373
  %v375 = vpop.f32.mrb[0].mxu0
  %v376 = vpop.f32.mrb[0].mxu0
  %v377 = vadd.f32 %v86, %v376
  %v378 = vpop.f32.mrb[0].mxu0
  %379 = vdwg.mxu0
  %380 = vst [vmem:[#allocation2] sm:$0xff] %v277
  %381 = vst [vmem:[#allocation2 + $0x8] sm:$0xff] %v279
  %382 = vst [vmem:[#allocation2 + $0x10] sm:$0xff] %v350
  %383 = vst [vmem:[#allocation2 + $0x18] sm:$0xff] %v281
  %384 = vst [vmem:[#allocation2 + $0x20] sm:$0xff] %v283
  %385 = vst [vmem:[#allocation2 + $0x28] sm:$0xff] %v353
  %386 = vst [vmem:[#allocation2 + $0x30] sm:$0xff] %v287
  %387 = vst [vmem:[#allocation2 + $0x38] sm:$0xff] %v289
  %388 = vst [vmem:[#allocation2 + $0x40] sm:$0xff] %v358
  %389 = vst [vmem:[#allocation2 + $0x48] sm:$0xff] %v291
  %390 = vst [vmem:[#allocation2 + $0x50] sm:$0xff] %v293
  %391 = vst [vmem:[#allocation2 + $0x58] sm:$0xff] %v361
  %392 = vst [vmem:[#allocation2 + $0x60] sm:$0xff] %v297
  %393 = vst [vmem:[#allocation2 + $0x68] sm:$0xff] %v299
  %394 = vst [vmem:[#allocation2 + $0x70] sm:$0xff] %v366
  %395 = vst [vmem:[#allocation2 + $0x78] sm:$0xff] %v301
  %396 = vst [vmem:[#allocation2 + $0x80] sm:$0xff] %v303
  %397 = vst [vmem:[#allocation2 + $0x88] sm:$0xff] %v369
  %398 = vst [vmem:[#allocation2 + $0x90] sm:$0xff] %v307
  %399 = vst [vmem:[#allocation2 + $0x98] sm:$0xff] %v309
  %400 = vst [vmem:[#allocation2 + $0xa0] sm:$0xff] %v374
  %401 = vst [vmem:[#allocation2 + $0xa8] sm:$0xff] %v311
  %402 = vst [vmem:[#allocation2 + $0xb0] sm:$0xff] %v313
  %403 = vst [vmem:[#allocation2 + $0xb8] sm:$0xff] %v377
  %v404 = vld [vmem:[%s2] sm:$0xff]
  %v405 = vld [vmem:[%s2 + $0x8] sm:$0xf]
  %v406 = vld [vmem:[%s2 + $0xc] sm:$0xff]
  %v407 = vld [vmem:[%s2 + $0x14] sm:$0xf]
  %v408 = vld [vmem:[%s2 + $0x18] sm:$0xff]
  %v409 = vld [vmem:[%s2 + $0x20] sm:$0xf]
  %v410 = vld [vmem:[%s2 + $0x24] sm:$0xff]
  %v411 = vld [vmem:[%s2 + $0x2c] sm:$0xf]
  %v412 = vld [vmem:[%s2 + $0x30] sm:$0xff]
  %v413 = vld [vmem:[%s2 + $0x38] sm:$0xf]
  %v414 = vld [vmem:[%s2 + $0x3c] sm:$0xff]
  %v415 = vld [vmem:[%s2 + $0x44] sm:$0xf]
  %v416 = vld [vmem:[%s2 + $0x48] sm:$0xff]
  %v417 = vld [vmem:[%s2 + $0x50] sm:$0xf]
  %v418 = vld [vmem:[%s2 + $0x54] sm:$0xff]
  %v419 = vld [vmem:[%s2 + $0x5c] sm:$0xf]
  %v420 = vld [vmem:[%s2 + $0x60] sm:$0xff]
  %v421 = vld [vmem:[%s2 + $0x68] sm:$0xf]
  %v422 = vld [vmem:[%s2 + $0x6c] sm:$0xff]
  %v423 = vld [vmem:[%s2 + $0x74] sm:$0xf]
  %v424 = vld [vmem:[%s2 + $0x78] sm:$0xff]
  %v425 = vld [vmem:[%s2 + $0x80] sm:$0xf]
  %v426 = vld [vmem:[%s2 + $0x84] sm:$0xff]
  %v427 = vld [vmem:[%s2 + $0x8c] sm:$0xf]
  %v428 = vld [vmem:[%s2 + $0x90] sm:$0xff]
  %v429 = vld [vmem:[%s2 + $0x98] sm:$0xf]
  %v430 = vld [vmem:[%s2 + $0x9c] sm:$0xff]
  %v431 = vld [vmem:[%s2 + $0xa4] sm:$0xf]
  %v432 = vld [vmem:[%s2 + $0xa8] sm:$0xff]
  %v433 = vld [vmem:[%s2 + $0xb0] sm:$0xf]
  %v434 = vld [vmem:[%s2 + $0xb4] sm:$0xff]
  %v435 = vld [vmem:[%s2 + $0xbc] sm:$0xf]
  %v436 = vld [vmem:[%s4] sm:$0x1]
  %s437 = smul.u32 0, 3
  %s438 = smul.addr %s437, 8
  %s439 = scalar_lea.vmem [#allocation2], %s438
  %v440 = vld [vmem:[%s439] sm:$0xff]
  %v441 = vld [vmem:[%s439 + $0x8] sm:$0xff]
  %v442 = vld [vmem:[%s439 + $0x10] sm:$0xff]
  %v475 = vunpack.c.l.b16 %v404
  %v476 = vunpack.c.h.b16 %v404
  %v477 = vunpack.c.l.b16 %v405
  %v478 = vunpack.c.l.b16 %v406
  %v479 = vunpack.c.h.b16 %v406
  %v480 = vunpack.c.l.b16 %v407
  %v481 = vunpack.c.l.b16 %v408
  %v482 = vunpack.c.h.b16 %v408
  %v483 = vunpack.c.l.b16 %v409
  %v484 = vunpack.c.l.b16 %v410
  %v485 = vunpack.c.h.b16 %v410
  %v486 = vunpack.c.l.b16 %v411
  %v487 = vunpack.c.l.b16 %v412
  %v488 = vunpack.c.h.b16 %v412
  %v489 = vunpack.c.l.b16 %v413
  %v490 = vunpack.c.l.b16 %v414
  %v491 = vunpack.c.h.b16 %v414
  %v492 = vunpack.c.l.b16 %v415
  %v493 = vunpack.c.l.b16 %v416
  %v494 = vunpack.c.h.b16 %v416
  %v495 = vunpack.c.l.b16 %v417
  %v496 = vunpack.c.l.b16 %v418
  %v497 = vunpack.c.h.b16 %v418
  %v498 = vunpack.c.l.b16 %v419
  %v499 = vunpack.c.l.b16 %v420
  %v500 = vunpack.c.h.b16 %v420
  %v501 = vunpack.c.l.b16 %v421
  %v502 = vunpack.c.l.b16 %v422
  %v503 = vunpack.c.h.b16 %v422
  %v504 = vunpack.c.l.b16 %v423
  %v505 = vunpack.c.l.b16 %v424
  %v506 = vunpack.c.h.b16 %v424
  %v507 = vunpack.c.l.b16 %v425
  %v508 = vunpack.c.l.b16 %v426
  %v509 = vunpack.c.h.b16 %v426
  %v510 = vunpack.c.l.b16 %v427
  %v511 = vunpack.c.l.b16 %v428
  %v512 = vunpack.c.h.b16 %v428
  %v513 = vunpack.c.l.b16 %v429
  %v514 = vunpack.c.l.b16 %v430
  %v515 = vunpack.c.h.b16 %v430
  %v516 = vunpack.c.l.b16 %v431
  %v517 = vunpack.c.l.b16 %v432
  %v518 = vunpack.c.h.b16 %v432
  %v519 = vunpack.c.l.b16 %v433
  %v520 = vunpack.c.l.b16 %v434
  %v521 = vunpack.c.h.b16 %v434
  %v522 = vunpack.c.l.b16 %v435
  %v523 = vpack.c.b16 %v478, %v475
  %v524 = vpack.c.b16 %v479, %v476
  %v525 = vpack.c.b16 %v480, %v477
  %v526 = vpack.c.b16 %v484, %v481
  %v527 = vpack.c.b16 %v485, %v482
  %v528 = vpack.c.b16 %v486, %v483
  %v529 = vpack.c.b16 %v490, %v487
  %v530 = vpack.c.b16 %v491, %v488
  %v531 = vpack.c.b16 %v492, %v489
  %v532 = vpack.c.b16 %v496, %v493
  %v533 = vpack.c.b16 %v497, %v494
  %v534 = vpack.c.b16 %v498, %v495
  %v535 = vpack.c.b16 %v502, %v499
  %v536 = vpack.c.b16 %v503, %v500
  %v537 = vpack.c.b16 %v504, %v501
  %v538 = vpack.c.b16 %v508, %v505
  %v539 = vpack.c.b16 %v509, %v506
  %v540 = vpack.c.b16 %v510, %v507
  %v541 = vpack.c.b16 %v514, %v511
  %v542 = vpack.c.b16 %v515, %v512
  %v543 = vpack.c.b16 %v516, %v513
  %v544 = vpack.c.b16 %v520, %v517
  %v545 = vpack.c.b16 %v521, %v518
  %v546 = vpack.c.b16 %v522, %v519
  %571 = vmatprep.subr.bf16.mxu0 %v524
  %572 = vmatpush1.bf16.msra.mxu0 %v523
  %573 = vmatprep.subr.bf16.mxu0 %v527
  %574 = vmatpush1.bf16.msra.mxu0 %v526
  %575 = vmatprep.subr.bf16.mxu0 %v530
  %576 = vmatpush1.bf16.msra.mxu0 %v529
  %577 = vmatprep.subr.bf16.mxu0 %v533
  %578 = vmatpush1.bf16.msra.mxu0 %v532
  %579 = vmatprep.subr.bf16.mxu0 %v536
  %580 = vmatpush1.bf16.msra.mxu0 %v535
  %581 = vmatprep.subr.bf16.mxu0 %v539
  %582 = vmatpush1.bf16.msra.mxu0 %v538
  %583 = vmatprep.subr.bf16.mxu0 %v542
  %584 = vmatpush1.bf16.msra.mxu0 %v541
  %585 = vmatprep.subr.bf16.mxu0 %v545
  %586 = vmatpush1.bf16.msra.mxu0 %v544
  %587 = vmatprep.subr.bf16.mxu0 0
  %588 = vmatpush1.bf16.msra.mxu0 0
  %589 = vmatprep.subr.bf16.mxu0 0
  %590 = vmatpush1.bf16.msra.mxu0 0
  %591 = vmatprep.subr.bf16.mxu0 0
  %592 = vmatpush1.bf16.msra.mxu0 0
  %593 = vmatprep.subr.bf16.mxu0 0
  %594 = vmatpush1.bf16.msra.mxu0 0
  %595 = vmatprep.subr.bf16.mxu0 0
  %596 = vmatpush1.bf16.msra.mxu0 0
  %597 = vmatprep.subr.bf16.mxu0 0
  %598 = vmatpush1.bf16.msra.mxu0 0
  %599 = vmatprep.subr.bf16.mxu0 0
  %600 = vmatpush1.bf16.msra.mxu0 0
  %601 = vmatprep.subr.bf16.mxu0 0
  %602 = vmatpush1.bf16.msra.mxu0 0
  %603 = vmatprep.mubr.bf16.mxu0 0
  %604 = vmatmul.mubr.bf16.gmra.mrb[0].mxu0 0
  %v605 = vpop.f32.mrb[0].mxu0
  %v606 = vadd.f32 0.0, %v605
  %v607 = vpop.f32.mrb[0].mxu0
  %v608 = vadd.f32 0.0, %v607
  %v609 = vpop.f32.mrb[0].mxu0
  %v610 = vpop.f32.mrb[0].mxu0
  %611 = vdwg.mxu0
  %612 = vmatprep.subr.bf16.mxu0 0
  %613 = vmatpush1.bf16.msra.mxu0 %v525
  %614 = vmatprep.subr.bf16.mxu0 0
  %615 = vmatpush1.bf16.msra.mxu0 %v528
  %616 = vmatprep.subr.bf16.mxu0 0
  %617 = vmatpush1.bf16.msra.mxu0 %v531
  %618 = vmatprep.subr.bf16.mxu0 0
  %619 = vmatpush1.bf16.msra.mxu0 %v534
  %620 = vmatprep.subr.bf16.mxu0 0
  %621 = vmatpush1.bf16.msra.mxu0 %v537
  %622 = vmatprep.subr.bf16.mxu0 0
  %623 = vmatpush1.bf16.msra.mxu0 %v540
  %624 = vmatprep.subr.bf16.mxu0 0
  %625 = vmatpush1.bf16.msra.mxu0 %v543
  %626 = vmatprep.subr.bf16.mxu0 0
  %627 = vmatpush1.bf16.msra.mxu0 %v546
  %628 = vmatprep.subr.bf16.mxu0 0
  %629 = vmatpush1.bf16.msra.mxu0 0
  %630 = vmatprep.subr.bf16.mxu0 0
  %631 = vmatpush1.bf16.msra.mxu0 0
  %632 = vmatprep.subr.bf16.mxu0 0
  %633 = vmatpush1.bf16.msra.mxu0 0
  %634 = vmatprep.subr.bf16.mxu0 0
  %635 = vmatpush1.bf16.msra.mxu0 0
  %636 = vmatprep.subr.bf16.mxu0 0
  %637 = vmatpush1.bf16.msra.mxu0 0
  %638 = vmatprep.subr.bf16.mxu0 0
  %639 = vmatpush1.bf16.msra.mxu0 0
  %640 = vmatprep.subr.bf16.mxu0 0
  %641 = vmatpush1.bf16.msra.mxu0 0
  %642 = vmatprep.subr.bf16.mxu0 0
  %643 = vmatpush1.bf16.msra.mxu0 0
  %644 = vmatprep.mubr.bf16.mxu0 0
  %645 = vmatmul.mubr.bf16.gmra.mrb[0].mxu0 0
  %v646 = vpop.f32.mrb[0].mxu0
  %v647 = vadd.f32 0.0, %v646
  %v648 = vpop.f32.mrb[0].mxu0
  %v649 = vpop.f32.mrb[0].mxu0
  %v650 = vpop.f32.mrb[0].mxu0
  %651 = vdwg.mxu0
  %v652 = vadd.f32 %v440, %v606
  %v653 = vxor.u32 %v652, 2147483648
  %v654 = vmul.f32 %v653, 1.442695
  %v655 = vpow.pop %v654
  %v656 = vadd.f32 %v655, 1.0
  %v657 = vrcp.pop %v656
  %v658 = vmul.f32 1.0, %v657
  %v659 = vadd.f32 %v441, %v608
  %v660 = vxor.u32 %v659, 2147483648
  %v661 = vmul.f32 %v660, 1.442695
  %v662 = vpow.pop %v661
  %v663 = vadd.f32 %v662, 1.0
  %v664 = vrcp.pop %v663
  %v665 = vmul.f32 1.0, %v664
  %v667 = vlaneseq
  %v668 = vshrl.u32 %v667, 7
  %v669 = vsub.s32 0, %v668
  %v670 = vrot.slane %v436, %v669
  %v672 = vadd.f32 %v647, %v670
  %v673 = vmul.f32 %v658, %v672
  %v674 = vadd.f32 %v442, %v673
  %v675 = vtanh.pop %v674
  %v676 = vsub.f32 1.0, %v665
  %v677 = vmul.f32 %v676, %v675
  %v678 = vmul.f32 %v665, 0.0
  %v679 = vadd.f32 %v677, %v678
  %s680 = smul.u32 1, 3
  %s681 = smul.addr %s680, 8
  %s682 = scalar_lea.vmem [#allocation2], %s681
  %v683 = vld [vmem:[%s682] sm:$0xff]
  %v684 = vld [vmem:[%s682 + $0x8] sm:$0xff]
  %v685 = vld [vmem:[%s682 + $0x10] sm:$0xff]
  %v686 = vpack.c.bf16 %v679, %v679
  %687 = vmatprep.subr.bf16.mxu0 %v524
  %688 = vmatpush1.bf16.msra.mxu0 %v523
  %689 = vmatprep.subr.bf16.mxu0 %v527
  %690 = vmatpush1.bf16.msra.mxu0 %v526
  %691 = vmatprep.subr.bf16.mxu0 %v530
  %692 = vmatpush1.bf16.msra.mxu0 %v529
  %693 = vmatprep.subr.bf16.mxu0 %v533
  %694 = vmatpush1.bf16.msra.mxu0 %v532
  %695 = vmatprep.subr.bf16.mxu0 %v536
  %696 = vmatpush1.bf16.msra.mxu0 %v535
  %697 = vmatprep.subr.bf16.mxu0 %v539
  %698 = vmatpush1.bf16.msra.mxu0 %v538
  %699 = vmatprep.subr.bf16.mxu0 %v542
  %700 = vmatpush1.bf16.msra.mxu0 %v541
  %701 = vmatprep.subr.bf16.mxu0 %v545
  %702 = vmatpush1.bf16.msra.mxu0 %v544
  %703 = vmatprep.subr.bf16.mxu0 0
  %704 = vmatpush1.bf16.msra.mxu0 0
  %705 = vmatprep.subr.bf16.mxu0 0
  %706 = vmatpush1.bf16.msra.mxu0 0
  %707 = vmatprep.subr.bf16.mxu0 0
  %708 = vmatpush1.bf16.msra.mxu0 0
  %709 = vmatprep.subr.bf16.mxu0 0
  %710 = vmatpush1.bf16.msra.mxu0 0
  %711 = vmatprep.subr.bf16.mxu0 0
  %712 = vmatpush1.bf16.msra.mxu0 0
  %713 = vmatprep.subr.bf16.mxu0 0
  %714 = vmatpush1.bf16.msra.mxu0 0
  %715 = vmatprep.subr.bf16.mxu0 0
  %716 = vmatpush1.bf16.msra.mxu0 0
  %717 = vmatprep.subr.bf16.mxu0 0
  %718 = vmatpush1.bf16.msra.mxu0 0
  %719 = vmatprep.mubr.bf16.mxu0 0
  %720 = vmatmul.mubr.bf16.gmra.mrb[0].mxu0 %v686
  %v721 = vpop.f32.mrb[0].mxu0
  %v722 = vadd.f32 0.0, %v721
  %v723 = vpop.f32.mrb[0].mxu0
  %v724 = vadd.f32 0.0, %v723
  %v725 = vpop.f32.mrb[0].mxu0
  %v726 = vpop.f32.mrb[0].mxu0
  %727 = vdwg.mxu0
  %728 = vmatprep.subr.bf16.mxu0 0
  %729 = vmatpush1.bf16.msra.mxu0 %v525
  %730 = vmatprep.subr.bf16.mxu0 0
  %731 = vmatpush1.bf16.msra.mxu0 %v528
  %732 = vmatprep.subr.bf16.mxu0 0
  %733 = vmatpush1.bf16.msra.mxu0 %v531
  %734 = vmatprep.subr.bf16.mxu0 0
  %735 = vmatpush1.bf16.msra.mxu0 %v534
  %736 = vmatprep.subr.bf16.mxu0 0
  %737 = vmatpush1.bf16.msra.mxu0 %v537
  %738 = vmatprep.subr.bf16.mxu0 0
  %739 = vmatpush1.bf16.msra.mxu0 %v540
  %740 = vmatprep.subr.bf16.mxu0 0
  %741 = vmatpush1.bf16.msra.mxu0 %v543
  %742 = vmatprep.subr.bf16.mxu0 0
  %743 = vmatpush1.bf16.msra.mxu0 %v546
  %744 = vmatprep.subr.bf16.mxu0 0
  %745 = vmatpush1.bf16.msra.mxu0 0
  %746 = vmatprep.subr.bf16.mxu0 0
  %747 = vmatpush1.bf16.msra.mxu0 0
  %748 = vmatprep.subr.bf16.mxu0 0
  %749 = vmatpush1.bf16.msra.mxu0 0
  %750 = vmatprep.subr.bf16.mxu0 0
  %751 = vmatpush1.bf16.msra.mxu0 0
  %752 = vmatprep.subr.bf16.mxu0 0
  %753 = vmatpush1.bf16.msra.mxu0 0
  %754 = vmatprep.subr.bf16.mxu0 0
  %755 = vmatpush1.bf16.msra.mxu0 0
  %756 = vmatprep.subr.bf16.mxu0 0
  %757 = vmatpush1.bf16.msra.mxu0 0
  %758 = vmatprep.subr.bf16.mxu0 0
  %759 = vmatpush1.bf16.msra.mxu0 0
  %760 = vmatprep.mubr.bf16.mxu0 0
  %761 = vmatmul.mubr.bf16.gmra.mrb[0].mxu0 %v686
  %v762 = vpop.f32.mrb[0].mxu0
  %v763 = vadd.f32 0.0, %v762
  %v764 = vpop.f32.mrb[0].mxu0
  %v765 = vpop.f32.mrb[0].mxu0
  %v766 = vpop.f32.mrb[0].mxu0
  %767 = vdwg.mxu0
  %v768 = vadd.f32 %v683, %v722
  %v769 = vxor.u32 %v768, 2147483648
  %v770 = vmul.f32 %v769, 1.442695
  %v771 = vpow.pop %v770
  %v772 = vadd.f32 %v771, 1.0
  %v773 = vrcp.pop %v772
  %v774 = vmul.f32 1.0, %v773
  %v775 = vadd.f32 %v684, %v724
  %v776 = vxor.u32 %v775, 2147483648
  %v777 = vmul.f32 %v776, 1.442695
  %v778 = vpow.pop %v777
  %v779 = vadd.f32 %v778, 1.0
  %v780 = vrcp.pop %v779
  %v781 = vmul.f32 1.0, %v780
  %v782 = vadd.f32 %v763, %v670
  %v783 = vmul.f32 %v774, %v782
  %v784 = vadd.f32 %v685, %v783
  %v785 = vtanh.pop %v784
  %v786 = vsub.f32 1.0, %v781
  %v787 = vmul.f32 %v786, %v785
  %v788 = vmul.f32 %v781, %v679
  %v789 = vadd.f32 %v787, %v788
  %s790 = smul.u32 2, 3
  %s791 = smul.addr %s790, 8
  %s792 = scalar_lea.vmem [#allocation2], %s791
  %v793 = vld [vmem:[%s792] sm:$0xff]
  %v794 = vld [vmem:[%s792 + $0x8] sm:$0xff]
  %v795 = vld [vmem:[%s792 + $0x10] sm:$0xff]
  %v796 = vpack.c.bf16 %v789, %v789
  %797 = vmatprep.subr.bf16.mxu0 %v524
  %798 = vmatpush1.bf16.msra.mxu0 %v523
  %799 = vmatprep.subr.bf16.mxu0 %v527
  %800 = vmatpush1.bf16.msra.mxu0 %v526
  %801 = vmatprep.subr.bf16.mxu0 %v530
  %802 = vmatpush1.bf16.msra.mxu0 %v529
  %803 = vmatprep.subr.bf16.mxu0 %v533
  %804 = vmatpush1.bf16.msra.mxu0 %v532
  %805 = vmatprep.subr.bf16.mxu0 %v536
  %806 = vmatpush1.bf16.msra.mxu0 %v535
  %807 = vmatprep.subr.bf16.mxu0 %v539
  %808 = vmatpush1.bf16.msra.mxu0 %v538
  %809 = vmatprep.subr.bf16.mxu0 %v542
  %810 = vmatpush1.bf16.msra.mxu0 %v541
  %811 = vmatprep.subr.bf16.mxu0 %v545
  %812 = vmatpush1.bf16.msra.mxu0 %v544
  %813 = vmatprep.subr.bf16.mxu0 0
  %814 = vmatpush1.bf16.msra.mxu0 0
  %815 = vmatprep.subr.bf16.mxu0 0
  %816 = vmatpush1.bf16.msra.mxu0 0
  %817 = vmatprep.subr.bf16.mxu0 0
  %818 = vmatpush1.bf16.msra.mxu0 0
  %819 = vmatprep.subr.bf16.mxu0 0
  %820 = vmatpush1.bf16.msra.mxu0 0
  %821 = vmatprep.subr.bf16.mxu0 0
  %822 = vmatpush1.bf16.msra.mxu0 0
  %823 = vmatprep.subr.bf16.mxu0 0
  %824 = vmatpush1.bf16.msra.mxu0 0
  %825 = vmatprep.subr.bf16.mxu0 0
  %826 = vmatpush1.bf16.msra.mxu0 0
  %827 = vmatprep.subr.bf16.mxu0 0
  %828 = vmatpush1.bf16.msra.mxu0 0
  %829 = vmatprep.mubr.bf16.mxu0 0
  %830 = vmatmul.mubr.bf16.gmra.mrb[0].mxu0 %v796
  %v831 = vpop.f32.mrb[0].mxu0
  %v832 = vadd.f32 0.0, %v831
  %v833 = vpop.f32.mrb[0].mxu0
  %v834 = vadd.f32 0.0, %v833
  %v835 = vpop.f32.mrb[0].mxu0
  %v836 = vpop.f32.mrb[0].mxu0
  %837 = vdwg.mxu0
  %838 = vmatprep.subr.bf16.mxu0 0
  %839 = vmatpush1.bf16.msra.mxu0 %v525
  %840 = vmatprep.subr.bf16.mxu0 0
  %841 = vmatpush1.bf16.msra.mxu0 %v528
  %842 = vmatprep.subr.bf16.mxu0 0
  %843 = vmatpush1.bf16.msra.mxu0 %v531
  %844 = vmatprep.subr.bf16.mxu0 0
  %845 = vmatpush1.bf16.msra.mxu0 %v534
  %846 = vmatprep.subr.bf16.mxu0 0
  %847 = vmatpush1.bf16.msra.mxu0 %v537
  %848 = vmatprep.subr.bf16.mxu0 0
  %849 = vmatpush1.bf16.msra.mxu0 %v540
  %850 = vmatprep.subr.bf16.mxu0 0
  %851 = vmatpush1.bf16.msra.mxu0 %v543
  %852 = vmatprep.subr.bf16.mxu0 0
  %853 = vmatpush1.bf16.msra.mxu0 %v546
  %854 = vmatprep.subr.bf16.mxu0 0
  %855 = vmatpush1.bf16.msra.mxu0 0
  %856 = vmatprep.subr.bf16.mxu0 0
  %857 = vmatpush1.bf16.msra.mxu0 0
  %858 = vmatprep.subr.bf16.mxu0 0
  %859 = vmatpush1.bf16.msra.mxu0 0
  %860 = vmatprep.subr.bf16.mxu0 0
  %861 = vmatpush1.bf16.msra.mxu0 0
  %862 = vmatprep.subr.bf16.mxu0 0
  %863 = vmatpush1.bf16.msra.mxu0 0
  %864 = vmatprep.subr.bf16.mxu0 0
  %865 = vmatpush1.bf16.msra.mxu0 0
  %866 = vmatprep.subr.bf16.mxu0 0
  %867 = vmatpush1.bf16.msra.mxu0 0
  %868 = vmatprep.subr.bf16.mxu0 0
  %869 = vmatpush1.bf16.msra.mxu0 0
  %870 = vmatprep.mubr.bf16.mxu0 0
  %871 = vmatmul.mubr.bf16.gmra.mrb[0].mxu0 %v796
  %v872 = vpop.f32.mrb[0].mxu0
  %v873 = vadd.f32 0.0, %v872
  %v874 = vpop.f32.mrb[0].mxu0
  %v875 = vpop.f32.mrb[0].mxu0
  %v876 = vpop.f32.mrb[0].mxu0
  %877 = vdwg.mxu0
  %v878 = vadd.f32 %v793, %v832
  %v879 = vxor.u32 %v878, 2147483648
  %v880 = vmul.f32 %v879, 1.442695
  %v881 = vpow.pop %v880
  %v882 = vadd.f32 %v881, 1.0
  %v883 = vrcp.pop %v882
  %v884 = vmul.f32 1.0, %v883
  %v885 = vadd.f32 %v794, %v834
  %v886 = vxor.u32 %v885, 2147483648
  %v887 = vmul.f32 %v886, 1.442695
  %v888 = vpow.pop %v887
  %v889 = vadd.f32 %v888, 1.0
  %v890 = vrcp.pop %v889
  %v891 = vmul.f32 1.0, %v890
  %v892 = vadd.f32 %v873, %v670
  %v893 = vmul.f32 %v884, %v892
  %v894 = vadd.f32 %v795, %v893
  %v895 = vtanh.pop %v894
  %v896 = vsub.f32 1.0, %v891
  %v897 = vmul.f32 %v896, %v895
  %v898 = vmul.f32 %v891, %v789
  %v899 = vadd.f32 %v897, %v898
  %s900 = smul.u32 3, 3
  %s901 = smul.addr %s900, 8
  %s902 = scalar_lea.vmem [#allocation2], %s901
  %v903 = vld [vmem:[%s902] sm:$0xff]
  %v904 = vld [vmem:[%s902 + $0x8] sm:$0xff]
  %v905 = vld [vmem:[%s902 + $0x10] sm:$0xff]
  %v906 = vpack.c.bf16 %v899, %v899
  %907 = vmatprep.subr.bf16.mxu0 %v524
  %908 = vmatpush1.bf16.msra.mxu0 %v523
  %909 = vmatprep.subr.bf16.mxu0 %v527
  %910 = vmatpush1.bf16.msra.mxu0 %v526
  %911 = vmatprep.subr.bf16.mxu0 %v530
  %912 = vmatpush1.bf16.msra.mxu0 %v529
  %913 = vmatprep.subr.bf16.mxu0 %v533
  %914 = vmatpush1.bf16.msra.mxu0 %v532
  %915 = vmatprep.subr.bf16.mxu0 %v536
  %916 = vmatpush1.bf16.msra.mxu0 %v535
  %917 = vmatprep.subr.bf16.mxu0 %v539
  %918 = vmatpush1.bf16.msra.mxu0 %v538
  %919 = vmatprep.subr.bf16.mxu0 %v542
  %920 = vmatpush1.bf16.msra.mxu0 %v541
  %921 = vmatprep.subr.bf16.mxu0 %v545
  %922 = vmatpush1.bf16.msra.mxu0 %v544
  %923 = vmatprep.subr.bf16.mxu0 0
  %924 = vmatpush1.bf16.msra.mxu0 0
  %925 = vmatprep.subr.bf16.mxu0 0
  %926 = vmatpush1.bf16.msra.mxu0 0
  %927 = vmatprep.subr.bf16.mxu0 0
  %928 = vmatpush1.bf16.msra.mxu0 0
  %929 = vmatprep.subr.bf16.mxu0 0
  %930 = vmatpush1.bf16.msra.mxu0 0
  %931 = vmatprep.subr.bf16.mxu0 0
  %932 = vmatpush1.bf16.msra.mxu0 0
  %933 = vmatprep.subr.bf16.mxu0 0
  %934 = vmatpush1.bf16.msra.mxu0 0
  %935 = vmatprep.subr.bf16.mxu0 0
  %936 = vmatpush1.bf16.msra.mxu0 0
  %937 = vmatprep.subr.bf16.mxu0 0
  %938 = vmatpush1.bf16.msra.mxu0 0
  %939 = vmatprep.mubr.bf16.mxu0 0
  %940 = vmatmul.mubr.bf16.gmra.mrb[0].mxu0 %v906
  %v941 = vpop.f32.mrb[0].mxu0
  %v942 = vadd.f32 0.0, %v941
  %v943 = vpop.f32.mrb[0].mxu0
  %v944 = vadd.f32 0.0, %v943
  %v945 = vpop.f32.mrb[0].mxu0
  %v946 = vpop.f32.mrb[0].mxu0
  %947 = vdwg.mxu0
  %948 = vmatprep.subr.bf16.mxu0 0
  %949 = vmatpush1.bf16.msra.mxu0 %v525
  %950 = vmatprep.subr.bf16.mxu0 0
  %951 = vmatpush1.bf16.msra.mxu0 %v528
  %952 = vmatprep.subr.bf16.mxu0 0
  %953 = vmatpush1.bf16.msra.mxu0 %v531
  %954 = vmatprep.subr.bf16.mxu0 0
  %955 = vmatpush1.bf16.msra.mxu0 %v534
  %956 = vmatprep.subr.bf16.mxu0 0
  %957 = vmatpush1.bf16.msra.mxu0 %v537
  %958 = vmatprep.subr.bf16.mxu0 0
  %959 = vmatpush1.bf16.msra.mxu0 %v540
  %960 = vmatprep.subr.bf16.mxu0 0
  %961 = vmatpush1.bf16.msra.mxu0 %v543
  %962 = vmatprep.subr.bf16.mxu0 0
  %963 = vmatpush1.bf16.msra.mxu0 %v546
  %964 = vmatprep.subr.bf16.mxu0 0
  %965 = vmatpush1.bf16.msra.mxu0 0
  %966 = vmatprep.subr.bf16.mxu0 0
  %967 = vmatpush1.bf16.msra.mxu0 0
  %968 = vmatprep.subr.bf16.mxu0 0
  %969 = vmatpush1.bf16.msra.mxu0 0
  %970 = vmatprep.subr.bf16.mxu0 0
  %971 = vmatpush1.bf16.msra.mxu0 0
  %972 = vmatprep.subr.bf16.mxu0 0
  %973 = vmatpush1.bf16.msra.mxu0 0
  %974 = vmatprep.subr.bf16.mxu0 0
  %975 = vmatpush1.bf16.msra.mxu0 0
  %976 = vmatprep.subr.bf16.mxu0 0
  %977 = vmatpush1.bf16.msra.mxu0 0
  %978 = vmatprep.subr.bf16.mxu0 0
  %979 = vmatpush1.bf16.msra.mxu0 0
  %980 = vmatprep.mubr.bf16.mxu0 0
  %981 = vmatmul.mubr.bf16.gmra.mrb[0].mxu0 %v906
  %v982 = vpop.f32.mrb[0].mxu0
  %v983 = vadd.f32 0.0, %v982
  %v984 = vpop.f32.mrb[0].mxu0
  %v985 = vpop.f32.mrb[0].mxu0
  %v986 = vpop.f32.mrb[0].mxu0
  %987 = vdwg.mxu0
  %v988 = vadd.f32 %v903, %v942
  %v989 = vxor.u32 %v988, 2147483648
  %v990 = vmul.f32 %v989, 1.442695
  %v991 = vpow.pop %v990
  %v992 = vadd.f32 %v991, 1.0
  %v993 = vrcp.pop %v992
  %v994 = vmul.f32 1.0, %v993
  %v995 = vadd.f32 %v904, %v944
  %v996 = vxor.u32 %v995, 2147483648
  %v997 = vmul.f32 %v996, 1.442695
  %v998 = vpow.pop %v997
  %v999 = vadd.f32 %v998, 1.0
  %v1000 = vrcp.pop %v999
  %v1001 = vmul.f32 1.0, %v1000
  %v1002 = vadd.f32 %v983, %v670
  %v1003 = vmul.f32 %v994, %v1002
  %v1004 = vadd.f32 %v905, %v1003
  %v1005 = vtanh.pop %v1004
  %v1006 = vsub.f32 1.0, %v1001
  %v1007 = vmul.f32 %v1006, %v1005
  %v1008 = vmul.f32 %v1001, %v899
  %v1009 = vadd.f32 %v1007, %v1008
  %s1010 = smul.u32 4, 3
  %s1011 = smul.addr %s1010, 8
  %s1012 = scalar_lea.vmem [#allocation2], %s1011
  %v1013 = vld [vmem:[%s1012] sm:$0xff]
  %v1014 = vld [vmem:[%s1012 + $0x8] sm:$0xff]
  %v1015 = vld [vmem:[%s1012 + $0x10] sm:$0xff]
  %v1016 = vpack.c.bf16 %v1009, %v1009
  %1017 = vmatprep.subr.bf16.mxu0 %v524
  %1018 = vmatpush1.bf16.msra.mxu0 %v523
  %1019 = vmatprep.subr.bf16.mxu0 %v527
  %1020 = vmatpush1.bf16.msra.mxu0 %v526
  %1021 = vmatprep.subr.bf16.mxu0 %v530
  %1022 = vmatpush1.bf16.msra.mxu0 %v529
  %1023 = vmatprep.subr.bf16.mxu0 %v533
  %1024 = vmatpush1.bf16.msra.mxu0 %v532
  %1025 = vmatprep.subr.bf16.mxu0 %v536
  %1026 = vmatpush1.bf16.msra.mxu0 %v535
  %1027 = vmatprep.subr.bf16.mxu0 %v539
  %1028 = vmatpush1.bf16.msra.mxu0 %v538
  %1029 = vmatprep.subr.bf16.mxu0 %v542
  %1030 = vmatpush1.bf16.msra.mxu0 %v541
  %1031 = vmatprep.subr.bf16.mxu0 %v545
  %1032 = vmatpush1.bf16.msra.mxu0 %v544
  %1033 = vmatprep.subr.bf16.mxu0 0
  %1034 = vmatpush1.bf16.msra.mxu0 0
  %1035 = vmatprep.subr.bf16.mxu0 0
  %1036 = vmatpush1.bf16.msra.mxu0 0
  %1037 = vmatprep.subr.bf16.mxu0 0
  %1038 = vmatpush1.bf16.msra.mxu0 0
  %1039 = vmatprep.subr.bf16.mxu0 0
  %1040 = vmatpush1.bf16.msra.mxu0 0
  %1041 = vmatprep.subr.bf16.mxu0 0
  %1042 = vmatpush1.bf16.msra.mxu0 0
  %1043 = vmatprep.subr.bf16.mxu0 0
  %1044 = vmatpush1.bf16.msra.mxu0 0
  %1045 = vmatprep.subr.bf16.mxu0 0
  %1046 = vmatpush1.bf16.msra.mxu0 0
  %1047 = vmatprep.subr.bf16.mxu0 0
  %1048 = vmatpush1.bf16.msra.mxu0 0
  %1049 = vmatprep.mubr.bf16.mxu0 0
  %1050 = vmatmul.mubr.bf16.gmra.mrb[0].mxu0 %v1016
  %v1051 = vpop.f32.mrb[0].mxu0
  %v1052 = vadd.f32 0.0, %v1051
  %v1053 = vpop.f32.mrb[0].mxu0
  %v1054 = vadd.f32 0.0, %v1053
  %v1055 = vpop.f32.mrb[0].mxu0
  %v1056 = vpop.f32.mrb[0].mxu0
  %1057 = vdwg.mxu0
  %1058 = vmatprep.subr.bf16.mxu0 0
  %1059 = vmatpush1.bf16.msra.mxu0 %v525
  %1060 = vmatprep.subr.bf16.mxu0 0
  %1061 = vmatpush1.bf16.msra.mxu0 %v528
  %1062 = vmatprep.subr.bf16.mxu0 0
  %1063 = vmatpush1.bf16.msra.mxu0 %v531
  %1064 = vmatprep.subr.bf16.mxu0 0
  %1065 = vmatpush1.bf16.msra.mxu0 %v534
  %1066 = vmatprep.subr.bf16.mxu0 0
  %1067 = vmatpush1.bf16.msra.mxu0 %v537
  %1068 = vmatprep.subr.bf16.mxu0 0
  %1069 = vmatpush1.bf16.msra.mxu0 %v540
  %1070 = vmatprep.subr.bf16.mxu0 0
  %1071 = vmatpush1.bf16.msra.mxu0 %v543
  %1072 = vmatprep.subr.bf16.mxu0 0
  %1073 = vmatpush1.bf16.msra.mxu0 %v546
  %1074 = vmatprep.subr.bf16.mxu0 0
  %1075 = vmatpush1.bf16.msra.mxu0 0
  %1076 = vmatprep.subr.bf16.mxu0 0
  %1077 = vmatpush1.bf16.msra.mxu0 0
  %1078 = vmatprep.subr.bf16.mxu0 0
  %1079 = vmatpush1.bf16.msra.mxu0 0
  %1080 = vmatprep.subr.bf16.mxu0 0
  %1081 = vmatpush1.bf16.msra.mxu0 0
  %1082 = vmatprep.subr.bf16.mxu0 0
  %1083 = vmatpush1.bf16.msra.mxu0 0
  %1084 = vmatprep.subr.bf16.mxu0 0
  %1085 = vmatpush1.bf16.msra.mxu0 0
  %1086 = vmatprep.subr.bf16.mxu0 0
  %1087 = vmatpush1.bf16.msra.mxu0 0
  %1088 = vmatprep.subr.bf16.mxu0 0
  %1089 = vmatpush1.bf16.msra.mxu0 0
  %1090 = vmatprep.mubr.bf16.mxu0 0
  %1091 = vmatmul.mubr.bf16.gmra.mrb[0].mxu0 %v1016
  %v1092 = vpop.f32.mrb[0].mxu0
  %v1093 = vadd.f32 0.0, %v1092
  %v1094 = vpop.f32.mrb[0].mxu0
  %v1095 = vpop.f32.mrb[0].mxu0
  %v1096 = vpop.f32.mrb[0].mxu0
  %1097 = vdwg.mxu0
  %v1098 = vadd.f32 %v1013, %v1052
  %v1099 = vxor.u32 %v1098, 2147483648
  %v1100 = vmul.f32 %v1099, 1.442695
  %v1101 = vpow.pop %v1100
  %v1102 = vadd.f32 %v1101, 1.0
  %v1103 = vrcp.pop %v1102
  %v1104 = vmul.f32 1.0, %v1103
  %v1105 = vadd.f32 %v1014, %v1054
  %v1106 = vxor.u32 %v1105, 2147483648
  %v1107 = vmul.f32 %v1106, 1.442695
  %v1108 = vpow.pop %v1107
  %v1109 = vadd.f32 %v1108, 1.0
  %v1110 = vrcp.pop %v1109
  %v1111 = vmul.f32 1.0, %v1110
  %v1112 = vadd.f32 %v1093, %v670
  %v1113 = vmul.f32 %v1104, %v1112
  %v1114 = vadd.f32 %v1015, %v1113
  %v1115 = vtanh.pop %v1114
  %v1116 = vsub.f32 1.0, %v1111
  %v1117 = vmul.f32 %v1116, %v1115
  %v1118 = vmul.f32 %v1111, %v1009
  %v1119 = vadd.f32 %v1117, %v1118
  %s1120 = smul.u32 5, 3
  %s1121 = smul.addr %s1120, 8
  %s1122 = scalar_lea.vmem [#allocation2], %s1121
  %v1123 = vld [vmem:[%s1122] sm:$0xff]
  %v1124 = vld [vmem:[%s1122 + $0x8] sm:$0xff]
  %v1125 = vld [vmem:[%s1122 + $0x10] sm:$0xff]
  %v1126 = vpack.c.bf16 %v1119, %v1119
  %1127 = vmatprep.subr.bf16.mxu0 %v524
  %1128 = vmatpush1.bf16.msra.mxu0 %v523
  %1129 = vmatprep.subr.bf16.mxu0 %v527
  %1130 = vmatpush1.bf16.msra.mxu0 %v526
  %1131 = vmatprep.subr.bf16.mxu0 %v530
  %1132 = vmatpush1.bf16.msra.mxu0 %v529
  %1133 = vmatprep.subr.bf16.mxu0 %v533
  %1134 = vmatpush1.bf16.msra.mxu0 %v532
  %1135 = vmatprep.subr.bf16.mxu0 %v536
  %1136 = vmatpush1.bf16.msra.mxu0 %v535
  %1137 = vmatprep.subr.bf16.mxu0 %v539
  %1138 = vmatpush1.bf16.msra.mxu0 %v538
  %1139 = vmatprep.subr.bf16.mxu0 %v542
  %1140 = vmatpush1.bf16.msra.mxu0 %v541
  %1141 = vmatprep.subr.bf16.mxu0 %v545
  %1142 = vmatpush1.bf16.msra.mxu0 %v544
  %1143 = vmatprep.subr.bf16.mxu0 0
  %1144 = vmatpush1.bf16.msra.mxu0 0
  %1145 = vmatprep.subr.bf16.mxu0 0
  %1146 = vmatpush1.bf16.msra.mxu0 0
  %1147 = vmatprep.subr.bf16.mxu0 0
  %1148 = vmatpush1.bf16.msra.mxu0 0
  %1149 = vmatprep.subr.bf16.mxu0 0
  %1150 = vmatpush1.bf16.msra.mxu0 0
  %1151 = vmatprep.subr.bf16.mxu0 0
  %1152 = vmatpush1.bf16.msra.mxu0 0
  %1153 = vmatprep.subr.bf16.mxu0 0
  %1154 = vmatpush1.bf16.msra.mxu0 0
  %1155 = vmatprep.subr.bf16.mxu0 0
  %1156 = vmatpush1.bf16.msra.mxu0 0
  %1157 = vmatprep.subr.bf16.mxu0 0
  %1158 = vmatpush1.bf16.msra.mxu0 0
  %1159 = vmatprep.mubr.bf16.mxu0 0
  %1160 = vmatmul.mubr.bf16.gmra.mrb[0].mxu0 %v1126
  %v1161 = vpop.f32.mrb[0].mxu0
  %v1162 = vadd.f32 0.0, %v1161
  %v1163 = vpop.f32.mrb[0].mxu0
  %v1164 = vadd.f32 0.0, %v1163
  %v1165 = vpop.f32.mrb[0].mxu0
  %v1166 = vpop.f32.mrb[0].mxu0
  %1167 = vdwg.mxu0
  %1168 = vmatprep.subr.bf16.mxu0 0
  %1169 = vmatpush1.bf16.msra.mxu0 %v525
  %1170 = vmatprep.subr.bf16.mxu0 0
  %1171 = vmatpush1.bf16.msra.mxu0 %v528
  %1172 = vmatprep.subr.bf16.mxu0 0
  %1173 = vmatpush1.bf16.msra.mxu0 %v531
  %1174 = vmatprep.subr.bf16.mxu0 0
  %1175 = vmatpush1.bf16.msra.mxu0 %v534
  %1176 = vmatprep.subr.bf16.mxu0 0
  %1177 = vmatpush1.bf16.msra.mxu0 %v537
  %1178 = vmatprep.subr.bf16.mxu0 0
  %1179 = vmatpush1.bf16.msra.mxu0 %v540
  %1180 = vmatprep.subr.bf16.mxu0 0
  %1181 = vmatpush1.bf16.msra.mxu0 %v543
  %1182 = vmatprep.subr.bf16.mxu0 0
  %1183 = vmatpush1.bf16.msra.mxu0 %v546
  %1184 = vmatprep.subr.bf16.mxu0 0
  %1185 = vmatpush1.bf16.msra.mxu0 0
  %1186 = vmatprep.subr.bf16.mxu0 0
  %1187 = vmatpush1.bf16.msra.mxu0 0
  %1188 = vmatprep.subr.bf16.mxu0 0
  %1189 = vmatpush1.bf16.msra.mxu0 0
  %1190 = vmatprep.subr.bf16.mxu0 0
  %1191 = vmatpush1.bf16.msra.mxu0 0
  %1192 = vmatprep.subr.bf16.mxu0 0
  %1193 = vmatpush1.bf16.msra.mxu0 0
  %1194 = vmatprep.subr.bf16.mxu0 0
  %1195 = vmatpush1.bf16.msra.mxu0 0
  %1196 = vmatprep.subr.bf16.mxu0 0
  %1197 = vmatpush1.bf16.msra.mxu0 0
  %1198 = vmatprep.subr.bf16.mxu0 0
  %1199 = vmatpush1.bf16.msra.mxu0 0
  %1200 = vmatprep.mubr.bf16.mxu0 0
  %1201 = vmatmul.mubr.bf16.gmra.mrb[0].mxu0 %v1126
  %v1202 = vpop.f32.mrb[0].mxu0
  %v1203 = vadd.f32 0.0, %v1202
  %v1204 = vpop.f32.mrb[0].mxu0
  %v1205 = vpop.f32.mrb[0].mxu0
  %v1206 = vpop.f32.mrb[0].mxu0
  %1207 = vdwg.mxu0
  %v1208 = vadd.f32 %v1123, %v1162
  %v1209 = vxor.u32 %v1208, 2147483648
  %v1210 = vmul.f32 %v1209, 1.442695
  %v1211 = vpow.pop %v1210
  %v1212 = vadd.f32 %v1211, 1.0
  %v1213 = vrcp.pop %v1212
  %v1214 = vmul.f32 1.0, %v1213
  %v1215 = vadd.f32 %v1124, %v1164
  %v1216 = vxor.u32 %v1215, 2147483648
  %v1217 = vmul.f32 %v1216, 1.442695
  %v1218 = vpow.pop %v1217
  %v1219 = vadd.f32 %v1218, 1.0
  %v1220 = vrcp.pop %v1219
  %v1221 = vmul.f32 1.0, %v1220
  %v1222 = vadd.f32 %v1203, %v670
  %v1223 = vmul.f32 %v1214, %v1222
  %v1224 = vadd.f32 %v1125, %v1223
  %v1225 = vtanh.pop %v1224
  %v1226 = vsub.f32 1.0, %v1221
  %v1227 = vmul.f32 %v1226, %v1225
  %v1228 = vmul.f32 %v1221, %v1119
  %v1229 = vadd.f32 %v1227, %v1228
  %s1230 = smul.u32 6, 3
  %s1231 = smul.addr %s1230, 8
  %s1232 = scalar_lea.vmem [#allocation2], %s1231
  %v1233 = vld [vmem:[%s1232] sm:$0xff]
  %v1234 = vld [vmem:[%s1232 + $0x8] sm:$0xff]
  %v1235 = vld [vmem:[%s1232 + $0x10] sm:$0xff]
  %v1236 = vpack.c.bf16 %v1229, %v1229
  %1237 = vmatprep.subr.bf16.mxu0 %v524
  %1238 = vmatpush1.bf16.msra.mxu0 %v523
  %1239 = vmatprep.subr.bf16.mxu0 %v527
  %1240 = vmatpush1.bf16.msra.mxu0 %v526
  %1241 = vmatprep.subr.bf16.mxu0 %v530
  %1242 = vmatpush1.bf16.msra.mxu0 %v529
  %1243 = vmatprep.subr.bf16.mxu0 %v533
  %1244 = vmatpush1.bf16.msra.mxu0 %v532
  %1245 = vmatprep.subr.bf16.mxu0 %v536
  %1246 = vmatpush1.bf16.msra.mxu0 %v535
  %1247 = vmatprep.subr.bf16.mxu0 %v539
  %1248 = vmatpush1.bf16.msra.mxu0 %v538
  %1249 = vmatprep.subr.bf16.mxu0 %v542
  %1250 = vmatpush1.bf16.msra.mxu0 %v541
  %1251 = vmatprep.subr.bf16.mxu0 %v545
  %1252 = vmatpush1.bf16.msra.mxu0 %v544
  %1253 = vmatprep.subr.bf16.mxu0 0
  %1254 = vmatpush1.bf16.msra.mxu0 0
  %1255 = vmatprep.subr.bf16.mxu0 0
  %1256 = vmatpush1.bf16.msra.mxu0 0
  %1257 = vmatprep.subr.bf16.mxu0 0
  %1258 = vmatpush1.bf16.msra.mxu0 0
  %1259 = vmatprep.subr.bf16.mxu0 0
  %1260 = vmatpush1.bf16.msra.mxu0 0
  %1261 = vmatprep.subr.bf16.mxu0 0
  %1262 = vmatpush1.bf16.msra.mxu0 0
  %1263 = vmatprep.subr.bf16.mxu0 0
  %1264 = vmatpush1.bf16.msra.mxu0 0
  %1265 = vmatprep.subr.bf16.mxu0 0
  %1266 = vmatpush1.bf16.msra.mxu0 0
  %1267 = vmatprep.subr.bf16.mxu0 0
  %1268 = vmatpush1.bf16.msra.mxu0 0
  %1269 = vmatprep.mubr.bf16.mxu0 0
  %1270 = vmatmul.mubr.bf16.gmra.mrb[0].mxu0 %v1236
  %v1271 = vpop.f32.mrb[0].mxu0
  %v1272 = vadd.f32 0.0, %v1271
  %v1273 = vpop.f32.mrb[0].mxu0
  %v1274 = vadd.f32 0.0, %v1273
  %v1275 = vpop.f32.mrb[0].mxu0
  %v1276 = vpop.f32.mrb[0].mxu0
  %1277 = vdwg.mxu0
  %1278 = vmatprep.subr.bf16.mxu0 0
  %1279 = vmatpush1.bf16.msra.mxu0 %v525
  %1280 = vmatprep.subr.bf16.mxu0 0
  %1281 = vmatpush1.bf16.msra.mxu0 %v528
  %1282 = vmatprep.subr.bf16.mxu0 0
  %1283 = vmatpush1.bf16.msra.mxu0 %v531
  %1284 = vmatprep.subr.bf16.mxu0 0
  %1285 = vmatpush1.bf16.msra.mxu0 %v534
  %1286 = vmatprep.subr.bf16.mxu0 0
  %1287 = vmatpush1.bf16.msra.mxu0 %v537
  %1288 = vmatprep.subr.bf16.mxu0 0
  %1289 = vmatpush1.bf16.msra.mxu0 %v540
  %1290 = vmatprep.subr.bf16.mxu0 0
  %1291 = vmatpush1.bf16.msra.mxu0 %v543
  %1292 = vmatprep.subr.bf16.mxu0 0
  %1293 = vmatpush1.bf16.msra.mxu0 %v546
  %1294 = vmatprep.subr.bf16.mxu0 0
  %1295 = vmatpush1.bf16.msra.mxu0 0
  %1296 = vmatprep.subr.bf16.mxu0 0
  %1297 = vmatpush1.bf16.msra.mxu0 0
  %1298 = vmatprep.subr.bf16.mxu0 0
  %1299 = vmatpush1.bf16.msra.mxu0 0
  %1300 = vmatprep.subr.bf16.mxu0 0
  %1301 = vmatpush1.bf16.msra.mxu0 0
  %1302 = vmatprep.subr.bf16.mxu0 0
  %1303 = vmatpush1.bf16.msra.mxu0 0
  %1304 = vmatprep.subr.bf16.mxu0 0
  %1305 = vmatpush1.bf16.msra.mxu0 0
  %1306 = vmatprep.subr.bf16.mxu0 0
  %1307 = vmatpush1.bf16.msra.mxu0 0
  %1308 = vmatprep.subr.bf16.mxu0 0
  %1309 = vmatpush1.bf16.msra.mxu0 0
  %1310 = vmatprep.mubr.bf16.mxu0 0
  %1311 = vmatmul.mubr.bf16.gmra.mrb[0].mxu0 %v1236
  %v1312 = vpop.f32.mrb[0].mxu0
  %v1313 = vadd.f32 0.0, %v1312
  %v1314 = vpop.f32.mrb[0].mxu0
  %v1315 = vpop.f32.mrb[0].mxu0
  %v1316 = vpop.f32.mrb[0].mxu0
  %1317 = vdwg.mxu0
  %v1318 = vadd.f32 %v1233, %v1272
  %v1319 = vxor.u32 %v1318, 2147483648
  %v1320 = vmul.f32 %v1319, 1.442695
  %v1321 = vpow.pop %v1320
  %v1322 = vadd.f32 %v1321, 1.0
  %v1323 = vrcp.pop %v1322
  %v1324 = vmul.f32 1.0, %v1323
  %v1325 = vadd.f32 %v1234, %v1274
  %v1326 = vxor.u32 %v1325, 2147483648
  %v1327 = vmul.f32 %v1326, 1.442695
  %v1328 = vpow.pop %v1327
  %v1329 = vadd.f32 %v1328, 1.0
  %v1330 = vrcp.pop %v1329
  %v1331 = vmul.f32 1.0, %v1330
  %v1332 = vadd.f32 %v1313, %v670
  %v1333 = vmul.f32 %v1324, %v1332
  %v1334 = vadd.f32 %v1235, %v1333
  %v1335 = vtanh.pop %v1334
  %v1336 = vsub.f32 1.0, %v1331
  %v1337 = vmul.f32 %v1336, %v1335
  %v1338 = vmul.f32 %v1331, %v1229
  %v1339 = vadd.f32 %v1337, %v1338
  %s1340 = smul.u32 7, 3
  %s1341 = smul.addr %s1340, 8
  %s1342 = scalar_lea.vmem [#allocation2], %s1341
  %v1343 = vld [vmem:[%s1342] sm:$0xff]
  %v1344 = vld [vmem:[%s1342 + $0x8] sm:$0xff]
  %v1345 = vld [vmem:[%s1342 + $0x10] sm:$0xff]
  %v1346 = vpack.c.bf16 %v1339, %v1339
  %1347 = vmatprep.subr.bf16.mxu0 %v524
  %1348 = vmatpush1.bf16.msra.mxu0 %v523
  %1349 = vmatprep.subr.bf16.mxu0 %v527
  %1350 = vmatpush1.bf16.msra.mxu0 %v526
  %1351 = vmatprep.subr.bf16.mxu0 %v530
  %1352 = vmatpush1.bf16.msra.mxu0 %v529
  %1353 = vmatprep.subr.bf16.mxu0 %v533
  %1354 = vmatpush1.bf16.msra.mxu0 %v532
  %1355 = vmatprep.subr.bf16.mxu0 %v536
  %1356 = vmatpush1.bf16.msra.mxu0 %v535
  %1357 = vmatprep.subr.bf16.mxu0 %v539
  %1358 = vmatpush1.bf16.msra.mxu0 %v538
  %1359 = vmatprep.subr.bf16.mxu0 %v542
  %1360 = vmatpush1.bf16.msra.mxu0 %v541
  %1361 = vmatprep.subr.bf16.mxu0 %v545
  %1362 = vmatpush1.bf16.msra.mxu0 %v544
  %1363 = vmatprep.subr.bf16.mxu0 0
  %1364 = vmatpush1.bf16.msra.mxu0 0
  %1365 = vmatprep.subr.bf16.mxu0 0
  %1366 = vmatpush1.bf16.msra.mxu0 0
  %1367 = vmatprep.subr.bf16.mxu0 0
  %1368 = vmatpush1.bf16.msra.mxu0 0
  %1369 = vmatprep.subr.bf16.mxu0 0
  %1370 = vmatpush1.bf16.msra.mxu0 0
  %1371 = vmatprep.subr.bf16.mxu0 0
  %1372 = vmatpush1.bf16.msra.mxu0 0
  %1373 = vmatprep.subr.bf16.mxu0 0
  %1374 = vmatpush1.bf16.msra.mxu0 0
  %1375 = vmatprep.subr.bf16.mxu0 0
  %1376 = vmatpush1.bf16.msra.mxu0 0
  %1377 = vmatprep.subr.bf16.mxu0 0
  %1378 = vmatpush1.bf16.msra.mxu0 0
  %1379 = vmatprep.mubr.bf16.mxu0 0
  %1380 = vmatmul.mubr.bf16.gmra.mrb[0].mxu0 %v1346
  %v1381 = vpop.f32.mrb[0].mxu0
  %v1382 = vadd.f32 0.0, %v1381
  %v1383 = vpop.f32.mrb[0].mxu0
  %v1384 = vadd.f32 0.0, %v1383
  %v1385 = vpop.f32.mrb[0].mxu0
  %v1386 = vpop.f32.mrb[0].mxu0
  %1387 = vdwg.mxu0
  %1388 = vmatprep.subr.bf16.mxu0 0
  %1389 = vmatpush1.bf16.msra.mxu0 %v525
  %1390 = vmatprep.subr.bf16.mxu0 0
  %1391 = vmatpush1.bf16.msra.mxu0 %v528
  %1392 = vmatprep.subr.bf16.mxu0 0
  %1393 = vmatpush1.bf16.msra.mxu0 %v531
  %1394 = vmatprep.subr.bf16.mxu0 0
  %1395 = vmatpush1.bf16.msra.mxu0 %v534
  %1396 = vmatprep.subr.bf16.mxu0 0
  %1397 = vmatpush1.bf16.msra.mxu0 %v537
  %1398 = vmatprep.subr.bf16.mxu0 0
  %1399 = vmatpush1.bf16.msra.mxu0 %v540
  %1400 = vmatprep.subr.bf16.mxu0 0
  %1401 = vmatpush1.bf16.msra.mxu0 %v543
  %1402 = vmatprep.subr.bf16.mxu0 0
  %1403 = vmatpush1.bf16.msra.mxu0 %v546
  %1404 = vmatprep.subr.bf16.mxu0 0
  %1405 = vmatpush1.bf16.msra.mxu0 0
  %1406 = vmatprep.subr.bf16.mxu0 0
  %1407 = vmatpush1.bf16.msra.mxu0 0
  %1408 = vmatprep.subr.bf16.mxu0 0
  %1409 = vmatpush1.bf16.msra.mxu0 0
  %1410 = vmatprep.subr.bf16.mxu0 0
  %1411 = vmatpush1.bf16.msra.mxu0 0
  %1412 = vmatprep.subr.bf16.mxu0 0
  %1413 = vmatpush1.bf16.msra.mxu0 0
  %1414 = vmatprep.subr.bf16.mxu0 0
  %1415 = vmatpush1.bf16.msra.mxu0 0
  %1416 = vmatprep.subr.bf16.mxu0 0
  %1417 = vmatpush1.bf16.msra.mxu0 0
  %1418 = vmatprep.subr.bf16.mxu0 0
  %1419 = vmatpush1.bf16.msra.mxu0 0
  %1420 = vmatprep.mubr.bf16.mxu0 0
  %1421 = vmatmul.mubr.bf16.gmra.mrb[0].mxu0 %v1346
  %v1422 = vpop.f32.mrb[0].mxu0
  %v1423 = vadd.f32 0.0, %v1422
  %v1424 = vpop.f32.mrb[0].mxu0
  %v1425 = vpop.f32.mrb[0].mxu0
  %v1426 = vpop.f32.mrb[0].mxu0
  %1427 = vdwg.mxu0
  %v1428 = vadd.f32 %v1343, %v1382
  %v1429 = vxor.u32 %v1428, 2147483648
  %v1430 = vmul.f32 %v1429, 1.442695
  %v1431 = vpow.pop %v1430
  %v1432 = vadd.f32 %v1431, 1.0
  %v1433 = vrcp.pop %v1432
  %v1434 = vmul.f32 1.0, %v1433
  %v1435 = vadd.f32 %v1344, %v1384
  %v1436 = vxor.u32 %v1435, 2147483648
  %v1437 = vmul.f32 %v1436, 1.442695
  %v1438 = vpow.pop %v1437
  %v1439 = vadd.f32 %v1438, 1.0
  %v1440 = vrcp.pop %v1439
  %v1441 = vmul.f32 1.0, %v1440
  %v1442 = vadd.f32 %v1423, %v670
  %v1443 = vmul.f32 %v1434, %v1442
  %v1444 = vadd.f32 %v1345, %v1443
  %v1445 = vtanh.pop %v1444
  %v1446 = vsub.f32 1.0, %v1441
  %v1447 = vmul.f32 %v1446, %v1445
  %v1448 = vmul.f32 %v1441, %v1339
  %v1449 = vadd.f32 %v1447, %v1448
  %v1450 = vpack.c.bf16 %v1449, %v1449
  %v1451 = vld [vmem:[%s5] sm:$0xf]
  %v1452 = vld [vmem:[%s5 + $0x4] sm:$0xf]
  %v1453 = vld [vmem:[%s5 + $0x8] sm:$0xf]
  %v1454 = vld [vmem:[%s5 + $0xc] sm:$0xf]
  %v1455 = vld [vmem:[%s5 + $0x10] sm:$0xf]
  %v1456 = vld [vmem:[%s5 + $0x14] sm:$0xf]
  %v1457 = vld [vmem:[%s5 + $0x18] sm:$0xf]
  %v1458 = vld [vmem:[%s5 + $0x1c] sm:$0xf]
  %v1459 = vld [vmem:[%s5 + $0x20] sm:$0xf]
  %v1460 = vld [vmem:[%s5 + $0x24] sm:$0xf]
  %v1461 = vld [vmem:[%s5 + $0x28] sm:$0xf]
  %v1462 = vld [vmem:[%s5 + $0x2c] sm:$0xf]
  %v1463 = vld [vmem:[%s5 + $0x30] sm:$0xf]
  %v1464 = vld [vmem:[%s5 + $0x34] sm:$0xf]
  %v1465 = vld [vmem:[%s5 + $0x38] sm:$0xf]
  %v1466 = vld [vmem:[%s5 + $0x3c] sm:$0xf]
  %v1467 = vld [vmem:[%s6] sm:$0x1]
  %v1469 = vlaneseq
  %v1470 = vshrl.u32 %v1469, 7
  %v1471 = vsub.s32 0, %v1470
  %v1472 = vrot.slane %v1467, %v1471
  %v1490 = vunpack.c.l.b16 %v1451
  %v1491 = vunpack.c.l.b16 %v1452
  %v1492 = vunpack.c.l.b16 %v1453
  %v1493 = vunpack.c.l.b16 %v1454
  %v1494 = vunpack.c.l.b16 %v1455
  %v1495 = vunpack.c.l.b16 %v1456
  %v1496 = vunpack.c.l.b16 %v1457
  %v1497 = vunpack.c.l.b16 %v1458
  %v1498 = vunpack.c.l.b16 %v1459
  %v1499 = vunpack.c.l.b16 %v1460
  %v1500 = vunpack.c.l.b16 %v1461
  %v1501 = vunpack.c.l.b16 %v1462
  %v1502 = vunpack.c.l.b16 %v1463
  %v1503 = vunpack.c.l.b16 %v1464
  %v1504 = vunpack.c.l.b16 %v1465
  %v1505 = vunpack.c.l.b16 %v1466
  %v1506 = vpack.c.b16 %v1491, %v1490
  %v1507 = vpack.c.b16 %v1493, %v1492
  %v1508 = vpack.c.b16 %v1495, %v1494
  %v1509 = vpack.c.b16 %v1497, %v1496
  %v1510 = vpack.c.b16 %v1499, %v1498
  %v1511 = vpack.c.b16 %v1501, %v1500
  %v1512 = vpack.c.b16 %v1503, %v1502
  %v1513 = vpack.c.b16 %v1505, %v1504
  %1522 = vmatprep.subr.bf16.mxu0 0
  %1523 = vmatpush1.bf16.msra.mxu0 %v1506
  %1524 = vmatprep.subr.bf16.mxu0 0
  %1525 = vmatpush1.bf16.msra.mxu0 %v1507
  %1526 = vmatprep.subr.bf16.mxu0 0
  %1527 = vmatpush1.bf16.msra.mxu0 %v1508
  %1528 = vmatprep.subr.bf16.mxu0 0
  %1529 = vmatpush1.bf16.msra.mxu0 %v1509
  %1530 = vmatprep.subr.bf16.mxu0 0
  %1531 = vmatpush1.bf16.msra.mxu0 %v1510
  %1532 = vmatprep.subr.bf16.mxu0 0
  %1533 = vmatpush1.bf16.msra.mxu0 %v1511
  %1534 = vmatprep.subr.bf16.mxu0 0
  %1535 = vmatpush1.bf16.msra.mxu0 %v1512
  %1536 = vmatprep.subr.bf16.mxu0 0
  %1537 = vmatpush1.bf16.msra.mxu0 %v1513
  %1538 = vmatprep.subr.bf16.mxu0 0
  %1539 = vmatpush1.bf16.msra.mxu0 0
  %1540 = vmatprep.subr.bf16.mxu0 0
  %1541 = vmatpush1.bf16.msra.mxu0 0
  %1542 = vmatprep.subr.bf16.mxu0 0
  %1543 = vmatpush1.bf16.msra.mxu0 0
  %1544 = vmatprep.subr.bf16.mxu0 0
  %1545 = vmatpush1.bf16.msra.mxu0 0
  %1546 = vmatprep.subr.bf16.mxu0 0
  %1547 = vmatpush1.bf16.msra.mxu0 0
  %1548 = vmatprep.subr.bf16.mxu0 0
  %1549 = vmatpush1.bf16.msra.mxu0 0
  %1550 = vmatprep.subr.bf16.mxu0 0
  %1551 = vmatpush1.bf16.msra.mxu0 0
  %1552 = vmatprep.subr.bf16.mxu0 0
  %1553 = vmatpush1.bf16.msra.mxu0 0
  %1554 = vmatprep.mubr.bf16.mxu0 0
  %1555 = vmatmul.mubr.bf16.gmra.mrb[0].mxu0 %v1450
  %v1556 = vpop.f32.mrb[0].mxu0
  %v1557 = vadd.f32 %v1472, %v1556
  %v1558 = vpop.f32.mrb[0].mxu0
  %v1559 = vpop.f32.mrb[0].mxu0
  %v1560 = vpop.f32.mrb[0].mxu0
  %1561 = vdwg.mxu0
  %v1562 = vmax.f32 %v1557, 0.0
  %v1563 = vpack.c.bf16 %v1562, %v1562
  %v1564 = vld [vmem:[%s7] sm:$0xf]
  %v1565 = vld [vmem:[%s7 + $0x4] sm:$0xf]
  %v1566 = vld [vmem:[%s7 + $0x8] sm:$0xf]
  %v1567 = vld [vmem:[%s7 + $0xc] sm:$0xf]
  %v1568 = vld [vmem:[%s7 + $0x10] sm:$0xf]
  %v1569 = vld [vmem:[%s7 + $0x14] sm:$0xf]
  %v1570 = vld [vmem:[%s7 + $0x18] sm:$0xf]
  %v1571 = vld [vmem:[%s7 + $0x1c] sm:$0xf]
  %v1572 = vld [vmem:[%s7 + $0x20] sm:$0xf]
  %v1573 = vld [vmem:[%s7 + $0x24] sm:$0xf]
  %v1574 = vld [vmem:[%s7 + $0x28] sm:$0xf]
  %v1575 = vld [vmem:[%s7 + $0x2c] sm:$0xf]
  %v1576 = vld [vmem:[%s7 + $0x30] sm:$0xf]
  %v1577 = vld [vmem:[%s7 + $0x34] sm:$0xf]
  %v1578 = vld [vmem:[%s7 + $0x38] sm:$0xf]
  %v1579 = vld [vmem:[%s7 + $0x3c] sm:$0xf]
  %v1580 = vld [vmem:[%s8] sm:$0x1]
  %v1582 = vlaneseq
  %v1583 = vshrl.u32 %v1582, 7
  %v1584 = vsub.s32 0, %v1583
  %v1585 = vrot.slane %v1580, %v1584
  %v1603 = vunpack.c.l.b16 %v1564
  %v1604 = vunpack.c.l.b16 %v1565
  %v1605 = vunpack.c.l.b16 %v1566
  %v1606 = vunpack.c.l.b16 %v1567
  %v1607 = vunpack.c.l.b16 %v1568
  %v1608 = vunpack.c.l.b16 %v1569
  %v1609 = vunpack.c.l.b16 %v1570
  %v1610 = vunpack.c.l.b16 %v1571
  %v1611 = vunpack.c.l.b16 %v1572
  %v1612 = vunpack.c.l.b16 %v1573
  %v1613 = vunpack.c.l.b16 %v1574
  %v1614 = vunpack.c.l.b16 %v1575
  %v1615 = vunpack.c.l.b16 %v1576
  %v1616 = vunpack.c.l.b16 %v1577
  %v1617 = vunpack.c.l.b16 %v1578
  %v1618 = vunpack.c.l.b16 %v1579
  %v1619 = vpack.c.b16 %v1604, %v1603
  %v1620 = vpack.c.b16 %v1606, %v1605
  %v1621 = vpack.c.b16 %v1608, %v1607
  %v1622 = vpack.c.b16 %v1610, %v1609
  %v1623 = vpack.c.b16 %v1612, %v1611
  %v1624 = vpack.c.b16 %v1614, %v1613
  %v1625 = vpack.c.b16 %v1616, %v1615
  %v1626 = vpack.c.b16 %v1618, %v1617
  %1635 = vmatprep.subr.bf16.mxu0 0
  %1636 = vmatpush1.bf16.msra.mxu0 %v1619
  %1637 = vmatprep.subr.bf16.mxu0 0
  %1638 = vmatpush1.bf16.msra.mxu0 %v1620
  %1639 = vmatprep.subr.bf16.mxu0 0
  %1640 = vmatpush1.bf16.msra.mxu0 %v1621
  %1641 = vmatprep.subr.bf16.mxu0 0
  %1642 = vmatpush1.bf16.msra.mxu0 %v1622
  %1643 = vmatprep.subr.bf16.mxu0 0
  %1644 = vmatpush1.bf16.msra.mxu0 %v1623
  %1645 = vmatprep.subr.bf16.mxu0 0
  %1646 = vmatpush1.bf16.msra.mxu0 %v1624
  %1647 = vmatprep.subr.bf16.mxu0 0
  %1648 = vmatpush1.bf16.msra.mxu0 %v1625
  %1649 = vmatprep.subr.bf16.mxu0 0
  %1650 = vmatpush1.bf16.msra.mxu0 %v1626
  %1651 = vmatprep.subr.bf16.mxu0 0
  %1652 = vmatpush1.bf16.msra.mxu0 0
  %1653 = vmatprep.subr.bf16.mxu0 0
  %1654 = vmatpush1.bf16.msra.mxu0 0
  %1655 = vmatprep.subr.bf16.mxu0 0
  %1656 = vmatpush1.bf16.msra.mxu0 0
  %1657 = vmatprep.subr.bf16.mxu0 0
  %1658 = vmatpush1.bf16.msra.mxu0 0
  %1659 = vmatprep.subr.bf16.mxu0 0
  %1660 = vmatpush1.bf16.msra.mxu0 0
  %1661 = vmatprep.subr.bf16.mxu0 0
  %1662 = vmatpush1.bf16.msra.mxu0 0
  %1663 = vmatprep.subr.bf16.mxu0 0
  %1664 = vmatpush1.bf16.msra.mxu0 0
  %1665 = vmatprep.subr.bf16.mxu0 0
  %1666 = vmatpush1.bf16.msra.mxu0 0
  %1667 = vmatprep.mubr.bf16.mxu0 0
  %1668 = vmatmul.mubr.bf16.gmra.mrb[0].mxu0 %v1563
  %v1669 = vpop.f32.mrb[0].mxu0
  %v1670 = vadd.f32 %v1585, %v1669
  %v1671 = vpop.f32.mrb[0].mxu0
  %v1672 = vpop.f32.mrb[0].mxu0
  %v1673 = vpop.f32.mrb[0].mxu0
  %1674 = vdwg.mxu0
  %1675 = vst [vmem:[%s9] sm:$0xff] %v1670
  // Predicated region
  $region38: #{classifier_forward.1} parent=0 // pred_check
    _
  $region39: #{classifier_forward.1} parent=0 // pred_check_branch
    %1677 = sbr.rel (0) target = $region41
  $region40: #{classifier_forward.1} parent=0 // pred_region
    _
  $region41: #{classifier_forward.1} parent=0 // pred_fallthru
    _
  // Predicated region
  $region42: #{classifier_forward.1} parent=0 // pred_check
    _
  $region43: #{classifier_forward.1} parent=0 // pred_check_branch
    %1679 = sbr.rel (0) target = $region45
  $region44: #{classifier_forward.1} parent=0 // pred_region
    _
  $region45: #{classifier_forward.1} parent=0 // pred_fallthru
    _

</llo_original>
